<compile_context>
chip_gen: v7x
topology: tpu7x:2x2x1
jax: 0.10.0
libtpu: 0.0.40
codegen_flags: <defaults>
</compile_context>

<pallas_src>
import functools
import math

import jax
import jax.numpy as jnp
from jax.experimental import pallas as pl
from jax.experimental.pallas import tpu as pltpu


def get_gkern(kernlen, std):
    """2D gaussian kernel, identical to the torch helper (deterministic)."""
    n = jnp.arange(0, kernlen, dtype=jnp.float32)
    n = n - jnp.mean(n)
    n = n / float(std)
    w = jnp.exp(-0.5 * n ** 2)
    g2 = jnp.outer(w, w)
    return g2 / jnp.sum(g2)


def _hog_kernel(*refs, nbins, pool, use_gw):
    # refs: x_ref (bc, H, W), bm_ref (W, Wout), [gw_ref (H, W)], out_ref (bc, Hout, nbins*Wout)
    if use_gw:
        x_ref, bm_ref, gw_ref, out_ref = refs
    else:
        x_ref, bm_ref, out_ref = refs
        gw_ref = None

    bc, H, W = x_ref.shape
    wout = bm_ref.shape[1]
    hout = H // pool

    x = x_ref[...]                                              # (bc, H, W)

    # ---- in-kernel 1-px reflect pad (rows, then columns)
    xr = jnp.concatenate([x[:, 1:2, :], x, x[:, H - 2:H - 1, :]], axis=1)     # (bc, H+2, W)
    xp = jnp.concatenate([xr[:, :, 1:2], xr, xr[:, :, W - 2:W - 1]], axis=2)  # (bc, H+2, W+2)

    # ---- separable Sobel (weight_x = [[1,0,-1],[2,0,-2],[1,0,-1]], weight_y = w_x.T)
    x0 = xp[:, 0:H, :]
    x1 = xp[:, 1:H + 1, :]
    x2 = xp[:, 2:H + 2, :]
    t = x0 + 2.0 * x1 + x2                                      # vertical smooth -> gx
    u = x0 - x2                                                 # vertical diff   -> gy
    gx = t[:, :, 0:W] - t[:, :, 2:W + 2]
    gy = u[:, :, 0:W] + 2.0 * u[:, :, 1:W + 1] + u[:, :, 2:W + 2]

    g2 = gx * gx + gy * gy
    norm = jnp.sqrt(g2)
    if use_gw:
        norm = norm * gw_ref[...][None, :, :]

    # ---- angular binning without atan2.
    # Canonical upper-half-plane direction (wx, wy), wy >= 0, theta in [0, pi).
    # bin(theta) = floor(theta/pi*nbins); indicator [theta >= beta_k] == [cos(theta) <=
    # cos(beta_k)] (cos strictly decreasing on [0,pi], >= tie direction preserved).
    # c = cos(theta) = wx * rsqrt(gx^2+gy^2); norm==0 pixels contribute 0 regardless.
    inv_r = jax.lax.rsqrt(jnp.maximum(g2, 1e-30))
    wx = jnp.where(gx > 0.0, gy, jnp.where(gx < 0.0, -gy, jnp.abs(gy)))
    c = wx * inv_r

    bm = bm_ref[...]                                            # (W, wout) column-pool matrix
    cosb = [math.cos(k * math.pi / nbins) for k in range(1, nbins)]

    pooled = []
    ss = None
    s_lo = None                                                 # [theta >= k*pi/nbins]
    for k in range(nbins):
        s_hi = (c <= cosb[k]) if k < nbins - 1 else None        # [theta >= (k+1)*pi/nbins]
        if s_lo is None and s_hi is None:                       # nbins == 1
            wk = norm
        elif s_lo is None:                                      # first bin
            wk = jnp.where(s_hi, 0.0, norm)
        elif s_hi is None:                                      # last bin
            wk = jnp.where(s_lo, norm, 0.0)
        else:
            wk = jnp.where(jnp.logical_and(s_lo, jnp.logical_not(s_hi)), norm, 0.0)
        s_lo = s_hi

        # column pool: one big-M MXU matmul (M = bc*H), per bin -> (bc*H, wout)
        cp = jnp.dot(wk.reshape(bc * H, W), bm, preferred_element_type=jnp.float32)
        # row pool on the pool x-smaller result (cheap sublane reduce)
        pk = jnp.sum(cp.reshape(bc, hout, pool, wout), axis=2)  # (bc, hout, wout)
        pooled.append(pk)
        ss = pk * pk if ss is None else ss + pk * pk

    # ---- L2 normalize over bins:  rsqrt(max(ss, 1e-24)) == 1 / max(sqrt(ss), 1e-12)
    inv = jax.lax.rsqrt(jnp.maximum(ss, 1e-24))
    # bins interleaved along lanes only on the tiny pooled data -> single dense store
    out = jnp.concatenate([p * inv for p in pooled], axis=-1)   # (bc, hout, nbins*wout)
    out_ref[...] = out


def _round_up(n, m):
    return ((n + m - 1) // m) * m


def _per_channel_vmem_bytes(H, W, nbins, pool):
    """Conservative per-channel VMEM footprint (bytes) of one grid step."""
    hout, wout = H // pool, W // pool
    r8 = lambda n: _round_up(n, 8)
    r128 = lambda n: _round_up(n, 128)
    full = r8(H) * r128(W)                       # one full-res f32 map
    padded = r8(H + 2) * r128(W + 2)             # reflect-padded tile + concat temp
    cell = r8(hout) * r128(wout)                 # one pooled f32 map
    return 4 * (2 * full                                   # double-buffered input block
                + 2 * r8(hout) * r128(nbins * wout)        # double-buffered output block
                + 2 * padded                               # xp + concat temporary
                + 10 * full                                # t,u,gx,gy,g2,norm,c,masks,wk
                + r8(H) * r128(wout)                       # column-pooled map
                + hout * r8(pool) * r128(wout)             # 4-D row-pool temporary
                + (nbins + 3) * cell)                      # per-bin pooled + ss + scaled


def _pick_tiling(bc_total, H, W, nbins, pool):
    """Pick bc_tile (a divisor of B*C) and vmem_limit_bytes from real hardware limits."""
    try:
        vmem_cap = int(pltpu.get_tpu_info().vmem_capacity_bytes)
    except Exception:
        vmem_cap = 64 << 20                      # v7x-safe fallback (per TensorCore)

    wout = W // pool
    per_ch = _per_channel_vmem_bytes(H, W, nbins, pool)
    const_bytes = 4 * (_round_up(W, 8) * _round_up(wout, 128)        # Bm resident
                       + _round_up(H, 8) * _round_up(W, 128))        # gw resident (if any)

    budget = max(per_ch, int(vmem_cap * 0.70) - const_bytes)
    max_by_vmem = max(1, budget // max(per_ch, 1))

    # keep >= 2 (prefer >= 4) grid steps: lets v7x shard across both TensorCores and
    # gives the software pipeline something to overlap.
    if bc_total >= 4:
        min_steps = 4
    elif bc_total >= 2:
        min_steps = 2
    else:
        min_steps = 1
    cap = max(1, min(max_by_vmem, bc_total // min_steps))

    bc_tile = 1
    for d in range(1, bc_total + 1):
        if bc_total % d == 0 and d <= cap:
            bc_tile = d

    need = bc_tile * per_ch + const_bytes
    vmem_limit = max(need + (need >> 2), 32 << 20)       # footprint + 25% headroom
    vmem_limit = int(min(vmem_limit, int(vmem_cap * 0.85)))
    vmem_limit = max(vmem_limit, 16 << 20)
    return bc_tile, vmem_limit


def hog_layer(x, nbins=9, pool=7, gaussian_window=0):
    """HOGLayerC.forward.  x: (B, 3, H, W) float32 -> (B, 3, nbins, H//pool, W//pool)."""
    B, C, H, W = x.shape
    assert H % pool == 0 and W % pool == 0
    Hout, Wout = H // pool, W // pool
    bc_total = B * C

    x = x.astype(jnp.float32).reshape(bc_total, H, W)   # unpadded; pad happens in-kernel

    # column block-sum pooling matrix (resident constant)
    Bm = (jnp.arange(W, dtype=jnp.int32)[:, None] // pool ==
          jnp.arange(Wout, dtype=jnp.int32)[None, :]).astype(jnp.float32)   # (W, Wout)

    bc_tile, vmem_limit = _pick_tiling(bc_total, H, W, nbins, pool)
    use_gw = bool(gaussian_window)

    inputs = [x, Bm]
    in_specs = [
        pl.BlockSpec((bc_tile, H, W), lambda i: (i, 0, 0)),
        pl.BlockSpec((W, Wout), lambda i: (0, 0)),        # resident constant
    ]
    if use_gw:
        assert H % gaussian_window == 0, f"h {H} gw {gaussian_window}"
        r = H // gaussian_window
        gwin = jnp.tile(get_gkern(gaussian_window, gaussian_window // 2),
                        (r, r)).astype(jnp.float32)
        inputs.append(gwin)
        in_specs.append(pl.BlockSpec((H, W), lambda i: (0, 0)))

    kernel = functools.partial(_hog_kernel, nbins=nbins, pool=pool, use_gw=use_gw)

    out = pl.pallas_call(
        kernel,
        out_shape=jax.ShapeDtypeStruct((bc_total, Hout, nbins * Wout), jnp.float32),
        grid=(bc_total // bc_tile,),
        in_specs=in_specs,
        out_specs=pl.BlockSpec((bc_tile, Hout, nbins * Wout), lambda i: (i, 0, 0)),
        compiler_params=pltpu.CompilerParams(
            dimension_semantics=("parallel",),
            vmem_limit_bytes=vmem_limit),
    )(*inputs)

    # (B*C, Hout, nbins*Wout) -> (B, C, nbins, Hout, Wout)
    out = out.reshape(B, C, Hout, nbins, Wout)
    return jnp.transpose(out, (0, 1, 3, 2, 4))


def hog_reference(x, nbins=9, pool=7, gaussian_window=0):
    """Pure-JAX reference (mirrors the PyTorch forward, uses arctan2)."""
    B, C, H, W = x.shape
    Hout, Wout = H // pool, W // pool
    xp = jnp.pad(x, ((0, 0), (0, 0), (1, 1), (1, 1)), mode="reflect")
    wx = jnp.array([[1., 0., -1.], [2., 0., -2.], [1., 0., -1.]], jnp.float32)
    wy = wx.T

    def dwconv(img, w):
        acc = jnp.zeros((B, C, H, W), jnp.float32)
        for ki in range(3):
            for kj in range(3):
                acc = acc + w[ki, kj] * img[:, :, ki:ki + H, kj:kj + W]
        return acc

    gx = dwconv(xp, wx)
    gy = dwconv(xp, wy)
    norm = jnp.sqrt(gx * gx + gy * gy)
    if gaussian_window:
        r = H // gaussian_window
        norm = norm * jnp.tile(get_gkern(gaussian_window, gaussian_window // 2), (r, r))
    phase = jnp.arctan2(gx, gy) / math.pi * nbins
    b = jnp.mod(jnp.floor(phase).astype(jnp.int32), nbins)
    onehot = (b[:, :, None] ==
              jnp.arange(nbins)[None, None, :, None, None]).astype(jnp.float32)
    hist = onehot * norm[:, :, None]
    hist = hist.reshape(B, C, nbins, Hout, pool, Wout, pool).sum(axis=(4, 6))
    l2 = jnp.sqrt(jnp.sum(hist * hist, axis=2, keepdims=True))
    return hist / jnp.maximum(l2, 1e-12)


if __name__ == "__main__":
    key = jax.random.PRNGKey(0)
    B, C, H, W = 2, 3, 14, 14          # pool=7 -> 2x2 cells
    x = jax.random.normal(key, (B, C, H, W), dtype=jnp.float32)

    out = jax.block_until_ready(hog_layer(x))
    ref = hog_reference(x)
    assert out.shape == (B, C, 9, H // 7, W // 7)
    assert jnp.allclose(out, ref, atol=3e-5, rtol=3e-5), \
        float(jnp.max(jnp.abs(out - ref)))

    # also exercise the gaussian-window branch
    out_g = jax.block_until_ready(hog_layer(x, gaussian_window=7))
    ref_g = hog_reference(x, gaussian_window=7)
    assert jnp.allclose(out_g, ref_g, atol=3e-5, rtol=3e-5), \
        float(jnp.max(jnp.abs(out_g - ref_g)))

    print("KERNEL_OK")
</pallas_src>

<mosaic_0001>
module attributes {stable_mosaic.version = 11 : i64} {
  func.func @_hog_kernel(%arg0: i32, %arg1: memref<1x14x14xf32, #tpu.memory_space<vmem>>, %arg2: memref<14x2xf32, #tpu.memory_space<vmem>>, %arg3: memref<1x2x18xf32, #tpu.memory_space<vmem>>) attributes {dimension_semantics = [#tpu.dimension_semantics<parallel>], iteration_bounds = array<i64: 6>, scalar_prefetch = 0 : i64, scratch_operands = 0 : i64, tpu.core_type = #tpu.core_type<tc>, window_params = [{transform_indices = @transform_0, window_bounds = array<i64: 1, 14, 14>}, {pipeline_mode = #tpu.pipeline_mode<synchronous>, transform_indices = @transform_1, window_bounds = array<i64: 14, 2>}, {transform_indices = @transform_2, window_bounds = array<i64: 1, 2, 18>}]} {
    %c0 = arith.constant 0 : index
    %c0_0 = arith.constant 0 : index
    %c0_1 = arith.constant 0 : index
    %0 = vector.load %arg1[%c0, %c0_0, %c0_1] : memref<1x14x14xf32, #tpu.memory_space<vmem>>, vector<1x14x14xf32>
    %1 = vector.extract_strided_slice %0 {offsets = [0, 1, 0], sizes = [1, 1, 14], strides = [1, 1, 1]} : vector<1x14x14xf32> to vector<1x1x14xf32>
    %2 = vector.extract_strided_slice %0 {offsets = [0, 12, 0], sizes = [1, 1, 14], strides = [1, 1, 1]} : vector<1x14x14xf32> to vector<1x1x14xf32>
    %3 = tpu.concatenate %1, %0, %2 in 1 : vector<1x1x14xf32>, vector<1x14x14xf32>, vector<1x1x14xf32> -> vector<1x16x14xf32>
    %4 = vector.extract_strided_slice %3 {offsets = [0, 0, 1], sizes = [1, 16, 1], strides = [1, 1, 1]} : vector<1x16x14xf32> to vector<1x16x1xf32>
    %5 = vector.extract_strided_slice %3 {offsets = [0, 0, 12], sizes = [1, 16, 1], strides = [1, 1, 1]} : vector<1x16x14xf32> to vector<1x16x1xf32>
    %6 = tpu.concatenate %4, %3, %5 in 2 : vector<1x16x1xf32>, vector<1x16x14xf32>, vector<1x16x1xf32> -> vector<1x16x16xf32>
    %7 = vector.extract_strided_slice %6 {offsets = [0, 0, 0], sizes = [1, 14, 16], strides = [1, 1, 1]} : vector<1x16x16xf32> to vector<1x14x16xf32>
    %8 = vector.extract_strided_slice %6 {offsets = [0, 1, 0], sizes = [1, 14, 16], strides = [1, 1, 1]} : vector<1x16x16xf32> to vector<1x14x16xf32>
    %9 = vector.extract_strided_slice %6 {offsets = [0, 2, 0], sizes = [1, 14, 16], strides = [1, 1, 1]} : vector<1x16x16xf32> to vector<1x14x16xf32>
    %cst = arith.constant 2.000000e+00 : f32
    %10 = vector.broadcast %cst : f32 to vector<1x14x16xf32>
    %11 = arith.mulf %10, %8 : vector<1x14x16xf32>
    %12 = arith.addf %7, %11 : vector<1x14x16xf32>
    %13 = arith.addf %12, %9 : vector<1x14x16xf32>
    %14 = arith.subf %7, %9 : vector<1x14x16xf32>
    %15 = vector.extract_strided_slice %13 {offsets = [0, 0, 0], sizes = [1, 14, 14], strides = [1, 1, 1]} : vector<1x14x16xf32> to vector<1x14x14xf32>
    %16 = vector.extract_strided_slice %13 {offsets = [0, 0, 2], sizes = [1, 14, 14], strides = [1, 1, 1]} : vector<1x14x16xf32> to vector<1x14x14xf32>
    %17 = arith.subf %15, %16 : vector<1x14x14xf32>
    %18 = vector.extract_strided_slice %14 {offsets = [0, 0, 0], sizes = [1, 14, 14], strides = [1, 1, 1]} : vector<1x14x16xf32> to vector<1x14x14xf32>
    %19 = vector.extract_strided_slice %14 {offsets = [0, 0, 1], sizes = [1, 14, 14], strides = [1, 1, 1]} : vector<1x14x16xf32> to vector<1x14x14xf32>
    %cst_2 = arith.constant 2.000000e+00 : f32
    %20 = vector.broadcast %cst_2 : f32 to vector<1x14x14xf32>
    %21 = arith.mulf %20, %19 : vector<1x14x14xf32>
    %22 = arith.addf %18, %21 : vector<1x14x14xf32>
    %23 = vector.extract_strided_slice %14 {offsets = [0, 0, 2], sizes = [1, 14, 14], strides = [1, 1, 1]} : vector<1x14x16xf32> to vector<1x14x14xf32>
    %24 = arith.addf %22, %23 : vector<1x14x14xf32>
    %25 = arith.mulf %17, %17 : vector<1x14x14xf32>
    %26 = arith.mulf %24, %24 : vector<1x14x14xf32>
    %27 = arith.addf %25, %26 : vector<1x14x14xf32>
    %28 = math.sqrt %27 : vector<1x14x14xf32>
    %cst_3 = arith.constant 1.000000e-30 : f32
    %29 = vector.broadcast %cst_3 : f32 to vector<1x14x14xf32>
    %30 = arith.maximumf %27, %29 : vector<1x14x14xf32>
    %31 = math.rsqrt %30 : vector<1x14x14xf32>
    %cst_4 = arith.constant 0.000000e+00 : f32
    %32 = vector.broadcast %cst_4 : f32 to vector<1x14x14xf32>
    %33 = arith.cmpf ogt, %17, %32 : vector<1x14x14xf32>
    %cst_5 = arith.constant 0.000000e+00 : f32
    %34 = vector.broadcast %cst_5 : f32 to vector<1x14x14xf32>
    %35 = arith.cmpf olt, %17, %34 : vector<1x14x14xf32>
    %cst_6 = arith.constant 0.000000e+00 : f32
    %36 = vector.broadcast %cst_6 : f32 to vector<1x14x14xf32>
    %37 = arith.subf %36, %24 : vector<1x14x14xf32>
    %38 = math.absf %24 : vector<1x14x14xf32>
    %39 = arith.select %35, %37, %38 : vector<1x14x14xi1>, vector<1x14x14xf32>
    %40 = arith.select %33, %24, %39 : vector<1x14x14xi1>, vector<1x14x14xf32>
    %41 = arith.mulf %40, %31 : vector<1x14x14xf32>
    %c0_7 = arith.constant 0 : index
    %c0_8 = arith.constant 0 : index
    %42 = vector.load %arg2[%c0_7, %c0_8] : memref<14x2xf32, #tpu.memory_space<vmem>>, vector<14x2xf32>
    %cst_9 = arith.constant 0.939692616 : f32
    %43 = vector.broadcast %cst_9 : f32 to vector<1x14x14xf32>
    %44 = arith.cmpf ole, %41, %43 : vector<1x14x14xf32>
    %cst_10 = arith.constant 0.000000e+00 : f32
    %45 = vector.broadcast %cst_10 : f32 to vector<1x14x14xf32>
    %46 = arith.select %44, %45, %28 : vector<1x14x14xi1>, vector<1x14x14xf32>
    %47 = vector.shape_cast %46 : vector<1x14x14xf32> to vector<14x14xf32>
    %cst_11 = arith.constant dense<0.000000e+00> : vector<14x2xf32>
    %48 = tpu.matmul %47, %42, %cst_11 {dimension_numbers = #tpu.dot_dimension_numbers<[1], [0], [0], [1], [0, 0, 1, 1], [], []>} : vector<14x14xf32>, vector<14x2xf32>, vector<14x2xf32> -> vector<14x2xf32>
    %49 = vector.shape_cast %48 : vector<14x2xf32> to vector<1x2x7x2xf32>
    %cst_12 = arith.constant dense<0.000000e+00> : vector<1x2x2xf32>
    %50 = vector.multi_reduction <add>, %49, %cst_12 [2] : vector<1x2x7x2xf32> to vector<1x2x2xf32>
    %51 = arith.mulf %50, %50 : vector<1x2x2xf32>
    %cst_13 = arith.constant 0.766044437 : f32
    %52 = vector.broadcast %cst_13 : f32 to vector<1x14x14xf32>
    %53 = arith.cmpf ole, %41, %52 : vector<1x14x14xf32>
    %cst_14 = arith.constant dense<true> : vector<1x14x14xi1>
    %54 = arith.xori %53, %cst_14 : vector<1x14x14xi1>
    %55 = arith.andi %44, %54 : vector<1x14x14xi1>
    %cst_15 = arith.constant 0.000000e+00 : f32
    %56 = vector.broadcast %cst_15 : f32 to vector<1x14x14xf32>
    %57 = arith.select %55, %28, %56 : vector<1x14x14xi1>, vector<1x14x14xf32>
    %58 = vector.shape_cast %57 : vector<1x14x14xf32> to vector<14x14xf32>
    %cst_16 = arith.constant dense<0.000000e+00> : vector<14x2xf32>
    %59 = tpu.matmul %58, %42, %cst_16 {dimension_numbers = #tpu.dot_dimension_numbers<[1], [0], [0], [1], [0, 0, 1, 1], [], []>} : vector<14x14xf32>, vector<14x2xf32>, vector<14x2xf32> -> vector<14x2xf32>
    %60 = vector.shape_cast %59 : vector<14x2xf32> to vector<1x2x7x2xf32>
    %cst_17 = arith.constant dense<0.000000e+00> : vector<1x2x2xf32>
    %61 = vector.multi_reduction <add>, %60, %cst_17 [2] : vector<1x2x7x2xf32> to vector<1x2x2xf32>
    %62 = arith.mulf %61, %61 : vector<1x2x2xf32>
    %63 = arith.addf %51, %62 : vector<1x2x2xf32>
    %cst_18 = arith.constant 5.000000e-01 : f32
    %64 = vector.broadcast %cst_18 : f32 to vector<1x14x14xf32>
    %65 = arith.cmpf ole, %41, %64 : vector<1x14x14xf32>
    %cst_19 = arith.constant dense<true> : vector<1x14x14xi1>
    %66 = arith.xori %65, %cst_19 : vector<1x14x14xi1>
    %67 = arith.andi %53, %66 : vector<1x14x14xi1>
    %cst_20 = arith.constant 0.000000e+00 : f32
    %68 = vector.broadcast %cst_20 : f32 to vector<1x14x14xf32>
    %69 = arith.select %67, %28, %68 : vector<1x14x14xi1>, vector<1x14x14xf32>
    %70 = vector.shape_cast %69 : vector<1x14x14xf32> to vector<14x14xf32>
    %cst_21 = arith.constant dense<0.000000e+00> : vector<14x2xf32>
    %71 = tpu.matmul %70, %42, %cst_21 {dimension_numbers = #tpu.dot_dimension_numbers<[1], [0], [0], [1], [0, 0, 1, 1], [], []>} : vector<14x14xf32>, vector<14x2xf32>, vector<14x2xf32> -> vector<14x2xf32>
    %72 = vector.shape_cast %71 : vector<14x2xf32> to vector<1x2x7x2xf32>
    %cst_22 = arith.constant dense<0.000000e+00> : vector<1x2x2xf32>
    %73 = vector.multi_reduction <add>, %72, %cst_22 [2] : vector<1x2x7x2xf32> to vector<1x2x2xf32>
    %74 = arith.mulf %73, %73 : vector<1x2x2xf32>
    %75 = arith.addf %63, %74 : vector<1x2x2xf32>
    %cst_23 = arith.constant 0.173648179 : f32
    %76 = vector.broadcast %cst_23 : f32 to vector<1x14x14xf32>
    %77 = arith.cmpf ole, %41, %76 : vector<1x14x14xf32>
    %cst_24 = arith.constant dense<true> : vector<1x14x14xi1>
    %78 = arith.xori %77, %cst_24 : vector<1x14x14xi1>
    %79 = arith.andi %65, %78 : vector<1x14x14xi1>
    %cst_25 = arith.constant 0.000000e+00 : f32
    %80 = vector.broadcast %cst_25 : f32 to vector<1x14x14xf32>
    %81 = arith.select %79, %28, %80 : vector<1x14x14xi1>, vector<1x14x14xf32>
    %82 = vector.shape_cast %81 : vector<1x14x14xf32> to vector<14x14xf32>
    %cst_26 = arith.constant dense<0.000000e+00> : vector<14x2xf32>
    %83 = tpu.matmul %82, %42, %cst_26 {dimension_numbers = #tpu.dot_dimension_numbers<[1], [0], [0], [1], [0, 0, 1, 1], [], []>} : vector<14x14xf32>, vector<14x2xf32>, vector<14x2xf32> -> vector<14x2xf32>
    %84 = vector.shape_cast %83 : vector<14x2xf32> to vector<1x2x7x2xf32>
    %cst_27 = arith.constant dense<0.000000e+00> : vector<1x2x2xf32>
    %85 = vector.multi_reduction <add>, %84, %cst_27 [2] : vector<1x2x7x2xf32> to vector<1x2x2xf32>
    %86 = arith.mulf %85, %85 : vector<1x2x2xf32>
    %87 = arith.addf %75, %86 : vector<1x2x2xf32>
    %cst_28 = arith.constant -0.173648179 : f32
    %88 = vector.broadcast %cst_28 : f32 to vector<1x14x14xf32>
    %89 = arith.cmpf ole, %41, %88 : vector<1x14x14xf32>
    %cst_29 = arith.constant dense<true> : vector<1x14x14xi1>
    %90 = arith.xori %89, %cst_29 : vector<1x14x14xi1>
    %91 = arith.andi %77, %90 : vector<1x14x14xi1>
    %cst_30 = arith.constant 0.000000e+00 : f32
    %92 = vector.broadcast %cst_30 : f32 to vector<1x14x14xf32>
    %93 = arith.select %91, %28, %92 : vector<1x14x14xi1>, vector<1x14x14xf32>
    %94 = vector.shape_cast %93 : vector<1x14x14xf32> to vector<14x14xf32>
    %cst_31 = arith.constant dense<0.000000e+00> : vector<14x2xf32>
    %95 = tpu.matmul %94, %42, %cst_31 {dimension_numbers = #tpu.dot_dimension_numbers<[1], [0], [0], [1], [0, 0, 1, 1], [], []>} : vector<14x14xf32>, vector<14x2xf32>, vector<14x2xf32> -> vector<14x2xf32>
    %96 = vector.shape_cast %95 : vector<14x2xf32> to vector<1x2x7x2xf32>
    %cst_32 = arith.constant dense<0.000000e+00> : vector<1x2x2xf32>
    %97 = vector.multi_reduction <add>, %96, %cst_32 [2] : vector<1x2x7x2xf32> to vector<1x2x2xf32>
    %98 = arith.mulf %97, %97 : vector<1x2x2xf32>
    %99 = arith.addf %87, %98 : vector<1x2x2xf32>
    %cst_33 = arith.constant -5.000000e-01 : f32
    %100 = vector.broadcast %cst_33 : f32 to vector<1x14x14xf32>
    %101 = arith.cmpf ole, %41, %100 : vector<1x14x14xf32>
    %cst_34 = arith.constant dense<true> : vector<1x14x14xi1>
    %102 = arith.xori %101, %cst_34 : vector<1x14x14xi1>
    %103 = arith.andi %89, %102 : vector<1x14x14xi1>
    %cst_35 = arith.constant 0.000000e+00 : f32
    %104 = vector.broadcast %cst_35 : f32 to vector<1x14x14xf32>
    %105 = arith.select %103, %28, %104 : vector<1x14x14xi1>, vector<1x14x14xf32>
    %106 = vector.shape_cast %105 : vector<1x14x14xf32> to vector<14x14xf32>
    %cst_36 = arith.constant dense<0.000000e+00> : vector<14x2xf32>
    %107 = tpu.matmul %106, %42, %cst_36 {dimension_numbers = #tpu.dot_dimension_numbers<[1], [0], [0], [1], [0, 0, 1, 1], [], []>} : vector<14x14xf32>, vector<14x2xf32>, vector<14x2xf32> -> vector<14x2xf32>
    %108 = vector.shape_cast %107 : vector<14x2xf32> to vector<1x2x7x2xf32>
    %cst_37 = arith.constant dense<0.000000e+00> : vector<1x2x2xf32>
    %109 = vector.multi_reduction <add>, %108, %cst_37 [2] : vector<1x2x7x2xf32> to vector<1x2x2xf32>
    %110 = arith.mulf %109, %109 : vector<1x2x2xf32>
    %111 = arith.addf %99, %110 : vector<1x2x2xf32>
    %cst_38 = arith.constant -0.766044437 : f32
    %112 = vector.broadcast %cst_38 : f32 to vector<1x14x14xf32>
    %113 = arith.cmpf ole, %41, %112 : vector<1x14x14xf32>
    %cst_39 = arith.constant dense<true> : vector<1x14x14xi1>
    %114 = arith.xori %113, %cst_39 : vector<1x14x14xi1>
    %115 = arith.andi %101, %114 : vector<1x14x14xi1>
    %cst_40 = arith.constant 0.000000e+00 : f32
    %116 = vector.broadcast %cst_40 : f32 to vector<1x14x14xf32>
    %117 = arith.select %115, %28, %116 : vector<1x14x14xi1>, vector<1x14x14xf32>
    %118 = vector.shape_cast %117 : vector<1x14x14xf32> to vector<14x14xf32>
    %cst_41 = arith.constant dense<0.000000e+00> : vector<14x2xf32>
    %119 = tpu.matmul %118, %42, %cst_41 {dimension_numbers = #tpu.dot_dimension_numbers<[1], [0], [0], [1], [0, 0, 1, 1], [], []>} : vector<14x14xf32>, vector<14x2xf32>, vector<14x2xf32> -> vector<14x2xf32>
    %120 = vector.shape_cast %119 : vector<14x2xf32> to vector<1x2x7x2xf32>
    %cst_42 = arith.constant dense<0.000000e+00> : vector<1x2x2xf32>
    %121 = vector.multi_reduction <add>, %120, %cst_42 [2] : vector<1x2x7x2xf32> to vector<1x2x2xf32>
    %122 = arith.mulf %121, %121 : vector<1x2x2xf32>
    %123 = arith.addf %111, %122 : vector<1x2x2xf32>
    %cst_43 = arith.constant -0.939692616 : f32
    %124 = vector.broadcast %cst_43 : f32 to vector<1x14x14xf32>
    %125 = arith.cmpf ole, %41, %124 : vector<1x14x14xf32>
    %cst_44 = arith.constant dense<true> : vector<1x14x14xi1>
    %126 = arith.xori %125, %cst_44 : vector<1x14x14xi1>
    %127 = arith.andi %113, %126 : vector<1x14x14xi1>
    %cst_45 = arith.constant 0.000000e+00 : f32
    %128 = vector.broadcast %cst_45 : f32 to vector<1x14x14xf32>
    %129 = arith.select %127, %28, %128 : vector<1x14x14xi1>, vector<1x14x14xf32>
    %130 = vector.shape_cast %129 : vector<1x14x14xf32> to vector<14x14xf32>
    %cst_46 = arith.constant dense<0.000000e+00> : vector<14x2xf32>
    %131 = tpu.matmul %130, %42, %cst_46 {dimension_numbers = #tpu.dot_dimension_numbers<[1], [0], [0], [1], [0, 0, 1, 1], [], []>} : vector<14x14xf32>, vector<14x2xf32>, vector<14x2xf32> -> vector<14x2xf32>
    %132 = vector.shape_cast %131 : vector<14x2xf32> to vector<1x2x7x2xf32>
    %cst_47 = arith.constant dense<0.000000e+00> : vector<1x2x2xf32>
    %133 = vector.multi_reduction <add>, %132, %cst_47 [2] : vector<1x2x7x2xf32> to vector<1x2x2xf32>
    %134 = arith.mulf %133, %133 : vector<1x2x2xf32>
    %135 = arith.addf %123, %134 : vector<1x2x2xf32>
    %cst_48 = arith.constant 0.000000e+00 : f32
    %136 = vector.broadcast %cst_48 : f32 to vector<1x14x14xf32>
    %137 = arith.select %125, %28, %136 : vector<1x14x14xi1>, vector<1x14x14xf32>
    %138 = vector.shape_cast %137 : vector<1x14x14xf32> to vector<14x14xf32>
    %cst_49 = arith.constant dense<0.000000e+00> : vector<14x2xf32>
    %139 = tpu.matmul %138, %42, %cst_49 {dimension_numbers = #tpu.dot_dimension_numbers<[1], [0], [0], [1], [0, 0, 1, 1], [], []>} : vector<14x14xf32>, vector<14x2xf32>, vector<14x2xf32> -> vector<14x2xf32>
    %140 = vector.shape_cast %139 : vector<14x2xf32> to vector<1x2x7x2xf32>
    %cst_50 = arith.constant dense<0.000000e+00> : vector<1x2x2xf32>
    %141 = vector.multi_reduction <add>, %140, %cst_50 [2] : vector<1x2x7x2xf32> to vector<1x2x2xf32>
    %142 = arith.mulf %141, %141 : vector<1x2x2xf32>
    %143 = arith.addf %135, %142 : vector<1x2x2xf32>
    %cst_51 = arith.constant 1.000000e-24 : f32
    %144 = vector.broadcast %cst_51 : f32 to vector<1x2x2xf32>
    %145 = arith.maximumf %143, %144 : vector<1x2x2xf32>
    %146 = math.rsqrt %145 : vector<1x2x2xf32>
    %147 = arith.mulf %50, %146 : vector<1x2x2xf32>
    %148 = arith.mulf %61, %146 : vector<1x2x2xf32>
    %149 = arith.mulf %73, %146 : vector<1x2x2xf32>
    %150 = arith.mulf %85, %146 : vector<1x2x2xf32>
    %151 = arith.mulf %97, %146 : vector<1x2x2xf32>
    %152 = arith.mulf %109, %146 : vector<1x2x2xf32>
    %153 = arith.mulf %121, %146 : vector<1x2x2xf32>
    %154 = arith.mulf %133, %146 : vector<1x2x2xf32>
    %155 = arith.mulf %141, %146 : vector<1x2x2xf32>
    %156 = tpu.concatenate %147, %148, %149, %150, %151, %152, %153, %154, %155 in 2 : vector<1x2x2xf32>, vector<1x2x2xf32>, vector<1x2x2xf32>, vector<1x2x2xf32>, vector<1x2x2xf32>, vector<1x2x2xf32>, vector<1x2x2xf32>, vector<1x2x2xf32>, vector<1x2x2xf32> -> vector<1x2x18xf32>
    %c0_52 = arith.constant 0 : index
    %c0_53 = arith.constant 0 : index
    %c0_54 = arith.constant 0 : index
    %157 = vector.load %arg3[%c0_52, %c0_53, %c0_54] : memref<1x2x18xf32, #tpu.memory_space<vmem>>, vector<1x2x18xf32>
    tpu.vector_store %arg3[%c0_52, %c0_53, %c0_54], %156 {strides = array<i32>} : memref<1x2x18xf32, #tpu.memory_space<vmem>>, vector<1x2x18xf32>,
    return
  }
  func.func @transform_0(%arg0: i32) -> (i32, i32, i32) {
    %c0_i32 = arith.constant 0 : i32
    %c0_i32_0 = arith.constant 0 : i32
    %c0_i32_1 = arith.constant 0 : i32
    return %arg0, %c0_i32, %c0_i32_0 : i32, i32, i32
  }
  func.func @transform_1(%arg0: i32) -> (i32, i32) {
    %c0_i32 = arith.constant 0 : i32
    %c0_i32_0 = arith.constant 0 : i32
    %c0_i32_1 = arith.constant 0 : i32
    return %c0_i32, %c0_i32_0 : i32, i32
  }
  func.func @transform_2(%arg0: i32) -> (i32, i32, i32) {
    %c0_i32 = arith.constant 0 : i32
    %c0_i32_0 = arith.constant 0 : i32
    %c0_i32_1 = arith.constant 0 : i32
    return %arg0, %c0_i32, %c0_i32_0 : i32, i32, i32
  }
}

</mosaic_0001>

<llo_original>
// kernel: tpu_custom_call.1
$region0: #{tpu_custom_call.1}
  #allocation0 [shape = 'u32[]', space=smem, size = 0x4, offset = 0x4, fixed_abs, tag = 'smem constant byte address 0x4 - core index']
  #allocation1 [shape = 'u32[144,128]{1,0:T(1,128)}', space=vmem, size = 0x12000, scoped, tag = 'internal scratch']
  %s0 = inlined_call_operand.hbm [shape: f32[6,14,14], index: 0, kind: input, shape index: {}]
  %s1 = inlined_call_operand.vmem [shape: f32[14,2], index: 1, kind: input, shape index: {}]
  %s2 = inlined_call_operand.hbm [shape: f32[6,2,18], index: 2, kind: output, shape index: {}]
  %s3 = sld [smem:[#allocation0]]
  $region45: #{tpu_custom_call.1} parent=0
    _
  %s5 = ssub.s32 1, %s3
  %s6 = scalar_select 0, %s5, %s3
  $region1: #{tpu_custom_call.1} parent=0
    #allocation2 [shape = 'u8[16384]{0}', space=vmem, size = 0x4000, scoped, tag = 'input window, operand 0']
    #allocation3 [shape = 's32[2]{0}', space=sflag, size = 0x8, scoped, tag = 'scoped memory for tpu_custom_call.1']
    #allocation4 [shape = 's32[2]{0}', space=sflag, size = 0x8, scoped, tag = 'scoped memory for tpu_custom_call.1']
    #allocation5 [shape = 'u8[2048]{0}', space=vmem, size = 0x800, scoped, tag = 'output window, operand 0']
    %7 = vsyncpa [#allocation3], 0
    %s8 = scalar_lea.sflag [#allocation3], 1
    %9 = vsyncpa %s8, 0
    %10 = vsyncpa [#allocation4], 0
    %s11 = scalar_lea.sflag [#allocation4], 1
    %12 = vsyncpa %s11, 0
    loop: start=0, step=1, limit=8
    $region2: #{tpu_custom_call.1} parent=1 // loop_pre_header
      _
    $region3: #{tpu_custom_call.1} parent=1 // loop_header
      %s14 = sphi 0, %s18
      %p15 = scmp.ge.s32.totalorder %s14, 8
      %s24 = sphi 0, %s26
      %s27 = sphi 0, %s24
      %s28 = sphi 0, %s27
      %s44 = sphi 0, %s28
      %s48 = sphi 0, %s48
      %s50 = sphi 0, %s48
      %s51 = sphi 0, %s50
      %s65 = sphi 0, %s51
      %s71 = sphi 0, %s73
      %s74 = sphi 0, %s71
      %s75 = sphi 0, %s74
      %s91 = sphi 0, %s75
    $region4: #{tpu_custom_call.1} parent=1 // loop_header_branch
      %17 = sbr.rel (%p15) target = $region8
    $region5: #{tpu_custom_call.1} parent=1 // loop_body
      %s19 = ssub.s32 %s14, 1
      %s20 = ssub.s32 %s14, 2
      %s21 = sadd.s32 %s14, 1
      %s22 = ssub.s32 %s14, %s21
      %p23 = scmp.eq.s32.totalorder %s22, 0
      %s25 = sadd.s32 %s24, 1
      %s26 = scalar_select %p23, %s24, %s25
      %p29 = pneg %p23
      %p30 = scmp.eq.s32.totalorder %s14, 5
      %p31 = por %p29, %p30
      %p32 = scmp.ne.s32.totalorder %s24, %s27
      %p33 = scmp.eq.s32.totalorder %s14, 0
      %p34 = por %p32, %p33
      %p35 = scmp.ne.s32.totalorder %s24, %s27
      %p36 = scmp.eq.s32.totalorder %s19, 5
      %p37 = por %p35, %p36
      %p38 = scmp.ne.s32.totalorder %s27, %s28
      %p39 = scmp.eq.s32.totalorder %s19, 0
      %p40 = por %p38, %p39
      %p41 = scmp.ne.s32.totalorder %s27, %s28
      %p42 = scmp.eq.s32.totalorder %s20, 5
      %p43 = por %p41, %p42
      %p45 = scmp.ne.s32.totalorder %s28, %s44
      %p46 = scmp.eq.s32.totalorder %s20, 0
      %p47 = por %p45, %p46
      %s49 = sadd.s32 %s48, 1
      %p52 = scmp.eq.s32.totalorder %s14, 5
      %p53 = scmp.ne.s32.totalorder %s48, %s50
      %p54 = scmp.eq.s32.totalorder %s14, 0
      %p55 = por %p53, %p54
      %p56 = scmp.ne.s32.totalorder %s48, %s50
      %p57 = scmp.eq.s32.totalorder %s19, 5
      %p58 = por %p56, %p57
      %p59 = scmp.ne.s32.totalorder %s50, %s51
      %p60 = scmp.eq.s32.totalorder %s19, 0
      %p61 = por %p59, %p60
      %p62 = scmp.ne.s32.totalorder %s50, %s51
      %p63 = scmp.eq.s32.totalorder %s20, 5
      %p64 = por %p62, %p63
      %p66 = scmp.ne.s32.totalorder %s51, %s65
      %p67 = scmp.eq.s32.totalorder %s20, 0
      %p68 = por %p66, %p67
      %s69 = ssub.s32 %s14, %s21
      %p70 = scmp.eq.s32.totalorder %s69, 0
      %s72 = sadd.s32 %s71, 1
      %s73 = scalar_select %p70, %s71, %s72
      %p76 = pneg %p70
      %p77 = scmp.eq.s32.totalorder %s14, 5
      %p78 = por %p76, %p77
      %p79 = scmp.ne.s32.totalorder %s71, %s74
      %p80 = scmp.eq.s32.totalorder %s14, 0
      %p81 = por %p79, %p80
      %p82 = scmp.ne.s32.totalorder %s71, %s74
      %p83 = scmp.eq.s32.totalorder %s19, 5
      %p84 = por %p82, %p83
      %p85 = scmp.ne.s32.totalorder %s74, %s75
      %p86 = scmp.eq.s32.totalorder %s19, 0
      %p87 = por %p85, %p86
      %p88 = scmp.ne.s32.totalorder %s74, %s75
      %p89 = scmp.eq.s32.totalorder %s20, 5
      %p90 = por %p88, %p89
      %p92 = scmp.ne.s32.totalorder %s75, %s91
      %p93 = scmp.eq.s32.totalorder %s20, 0
      %p94 = por %p92, %p93
      %p95 = scmp.le.s32.totalorder 1, %s14
      %p96 = scmp.lt.s32.totalorder %s14, 7
      %p97 = pnand %p95, %p96
      %p98 = pneg %p97
      // Predicated region
      $region9: #{tpu_custom_call.1} parent=5 // pred_check
        _
      $region10: #{tpu_custom_call.1} parent=5 // pred_check_branch
        %100 = sbr.rel (%p97) target = $region12
      $region11: #{tpu_custom_call.1} parent=5 // pred_region
        %s101 = ssub.s32 %s14, 1
        // Predicated region
        $region13: #{tpu_custom_call.1} parent=11 // pred_check
          %p102 = pneg %p61
        $region14: #{tpu_custom_call.1} parent=11 // pred_check_branch
          %104 = sbr.rel (%p102) target = $region16
        $region15: #{tpu_custom_call.1} parent=11 // pred_region
          _
        $region16: #{tpu_custom_call.1} parent=11 // pred_fallthru
          _
      $region12: #{tpu_custom_call.1} parent=5 // pred_fallthru
        _
      %p105 = scmp.lt.s32.totalorder %s14, 6
      // Predicated region
      $region17: #{tpu_custom_call.1} parent=5 // pred_check
        %p106 = pneg %p105
      $region18: #{tpu_custom_call.1} parent=5 // pred_check_branch
        %108 = sbr.rel (%p106) target = $region20
      $region19: #{tpu_custom_call.1} parent=5 // pred_region
        // Predicated region
        $region21: #{tpu_custom_call.1} parent=19 // pred_check
          %p109 = pneg %p34
        $region22: #{tpu_custom_call.1} parent=19 // pred_check_branch
          %111 = sbr.rel (%p109) target = $region24
        $region23: #{tpu_custom_call.1} parent=19 // pred_region
          %s112 = sand.u32 %s24, 1
          %s113 = scalar_lea.sflag [#allocation3], %s112
          %s114 = sand.u32 %s24, 1
          %s115 = smul.addr %s114, 16
          %s116 = scalar_lea.vmem [#allocation2], %s115
          %s118 = ssub.s32 256, 256
          %119 = vsyncadd %s113, %s118
          %s120 = smul.addr %s14, 2
          %s121 = smul.addr %s120, 128
          %s122 = scalar_lea.hbm %s0, %s121
          %s123 = sshll.u32 %s116, 4
          %s124 = int_to_ptr.vmem [resolvable:$true] %s123
          %129 = dma.hbm_to_vmem [thread:$0]  %s122, 256, %s124, %s113, 128, 128, 8
        $region24: #{tpu_custom_call.1} parent=19 // pred_fallthru
          _
      $region20: #{tpu_custom_call.1} parent=5 // pred_fallthru
        _
      %p130 = scmp.le.s32.totalorder 1, %s14
      %p131 = scmp.lt.s32.totalorder %s14, 7
      %p132 = pnand %p130, %p131
      %p133 = pneg %p132
      // Predicated region
      $region25: #{tpu_custom_call.1} parent=5 // pred_check
        _
      $region26: #{tpu_custom_call.1} parent=5 // pred_check_branch
        %135 = sbr.rel (%p132) target = $region28
      $region27: #{tpu_custom_call.1} parent=5 // pred_region
        %s136 = ssub.s32 %s14, 1
        %s137 = sand.u32 %s27, 1
        %s138 = scalar_lea.sflag [#allocation3], %s137
        %s139 = sand.u32 %s27, 1
        %s140 = smul.addr %s139, 16
        %s141 = scalar_lea.vmem [#allocation2], %s140
        // Predicated region
        $region29: #{tpu_custom_call.1} parent=27 // pred_check
          %p142 = pneg %p40
        $region30: #{tpu_custom_call.1} parent=27 // pred_check_branch
          %144 = sbr.rel (%p142) target = $region32
        $region31: #{tpu_custom_call.1} parent=27 // pred_region
          %145 = dma.done %s138, 256
        $region32: #{tpu_custom_call.1} parent=27 // pred_fallthru
          _
        %s146 = sand.u32 %s27, 1
        %s147 = scalar_lea.sflag [#allocation3], %s146
        %s148 = sand.u32 %s27, 1
        %s149 = smul.addr %s148, 16
        %s150 = scalar_lea.vmem [#allocation2], %s149
        %p151 = pneg %p40
        %p152 = pneg %p37
        %p153 = pneg %p61
        %p154 = pneg %p58
        %p155 = pneg %p87
        %p156 = pneg %p84
        %s157 = sand.u32 %s74, 1
        %s158 = scalar_lea.sflag [#allocation4], %s157
        %s159 = sand.u32 %s74, 1
        %s160 = smul.addr %s159, 2
        %s161 = scalar_lea.vmem [#allocation5], %s160
        %v162 = vld [vmem:[%s141] sm:$0xff]
        %v163 = vld [vmem:[%s141 + $0x8] sm:$0x3f]
        %v165 = vrot.slane %v162, 1
        %vm168 = vcmask 1040384
        %v169 = vrot.slane %v162, 7
        %v170 = vrot.slane %v163, 7
        %v171 = vsel %vm168, %v169, %v170
        %v174 = vrot.slane %v163, 5
        %v176 = vsel %vm168, %v165, %v169
        %vm177 = vcmask 1046528
        %v178 = vsel %vm177, %v171, %v174
        %181 = vrot.lane.b32.xlu0 %v176, 127
        %v182 = vpop.permute.xlu0 %181
        %183 = vrot.lane.b32.xlu0 %v178, 127
        %v184 = vpop.permute.xlu0 %183
        %187 = vrot.lane.b32.xlu0 %v176, 1
        %v188 = vpop.permute.xlu0 %187
        %189 = vrot.lane.b32.xlu0 %v178, 1
        %v190 = vpop.permute.xlu0 %189
        %193 = vrot.lane.b32.xlu0 %v176, 3
        %v194 = vpop.permute.xlu0 %193
        %195 = vrot.lane.b32.xlu0 %v178, 3
        %v196 = vpop.permute.xlu0 %195
        %vm199 = vcmask 7168
        %v200 = vsel %vm199, %v182, %v188
        %v201 = vsel %vm199, %v184, %v190
        %vm202 = vcmask 121856
        %v203 = vsel %vm202, %v200, %v194
        %v204 = vsel %vm202, %v201, %v196
        %v205 = vmul.f32 %v203, 2.0
        %v206 = vmul.f32 %v204, 2.0
        %v209 = vrot.slane %v205, 1
        %v210 = vrot.slane %v206, 1
        %v211 = vsel %vm177, %v209, %v210
        %v214 = vadd.f32 %v203, %v211
        %v215 = vadd.f32 %v204, %v210
        %vm218 = vcmask 1045504
        %v219 = vrot.slane %v203, 2
        %v220 = vrot.slane %v204, 2
        %v221 = vsel %vm218, %v219, %v220
        %v224 = vadd.f32 %v214, %v221
        %v225 = vadd.f32 %v215, %v220
        %v226 = vsub.f32 %v203, %v221
        %v227 = vsub.f32 %v204, %v220
        %230 = vrot.lane.b32.xlu0 %v224, 126
        %v231 = vpop.permute.xlu0 %230
        %232 = vrot.lane.b32.xlu0 %v225, 126
        %v233 = vpop.permute.xlu0 %232
        %v236 = vsub.f32 %v224, %v231
        %v237 = vsub.f32 %v225, %v233
        %v238 = vmul.f32 %v226, 2.0
        %v239 = vmul.f32 %v227, 2.0
        %242 = vrot.lane.b32.xlu0 %v238, 127
        %v243 = vpop.permute.xlu0 %242
        %244 = vrot.lane.b32.xlu0 %v239, 127
        %v245 = vpop.permute.xlu0 %244
        %v248 = vadd.f32 %v226, %v243
        %v249 = vadd.f32 %v227, %v245
        %252 = vrot.lane.b32.xlu0 %v226, 126
        %v253 = vpop.permute.xlu0 %252
        %254 = vrot.lane.b32.xlu0 %v227, 126
        %v255 = vpop.permute.xlu0 %254
        %v258 = vadd.f32 %v248, %v253
        %v259 = vadd.f32 %v249, %v255
        %v260 = vmul.f32 %v236, %v236
        %v261 = vmul.f32 %v237, %v237
        %v262 = vmul.f32 %v258, %v258
        %v263 = vmul.f32 %v259, %v259
        %v264 = vadd.f32 %v260, %v262
        %v265 = vadd.f32 %v261, %v263
        %v266 = vrsqrt.pop %v264
        %v267 = vmul.f32 %v264, %v266
        %vm268 = vcmp.eq.f32.partialorder %v264, inf
        %v269 = vsel %vm268, %v264, %v267
        %vm270 = vcmp.eq.f32.partialorder %v264, 0.0
        %v271 = vand.u32 %v264, 2147483648
        %v272 = vsel %vm270, %v271, %v269
        %v273 = vrsqrt.pop %v265
        %v274 = vmul.f32 %v265, %v273
        %vm275 = vcmp.eq.f32.partialorder %v265, inf
        %v276 = vsel %vm275, %v265, %v274
        %vm277 = vcmp.eq.f32.partialorder %v265, 0.0
        %v278 = vand.u32 %v265, 2147483648
        %v279 = vsel %vm277, %v278, %v276
        %v280 = vmax.f32 %v264, 1e-30
        %v281 = vmax.f32 %v265, 1e-30
        %v282 = vrsqrt.pop %v280
        %v283 = vrsqrt.pop %v281
        %vm284 = vcmp.gt.f32.partialorder %v236, 0.0
        %vm285 = vcmp.gt.f32.partialorder %v237, 0.0
        %vm286 = vcmp.lt.f32.partialorder %v236, 0.0
        %vm287 = vcmp.lt.f32.partialorder %v237, 0.0
        %v288 = vsub.f32 0.0, %v258
        %v289 = vsub.f32 0.0, %v259
        %v290 = vand.u32 2147483647, %v258
        %v291 = vand.u32 2147483647, %v259
        %v292 = vsel %vm286, %v288, %v290
        %v293 = vsel %vm287, %v289, %v291
        %v294 = vsel %vm284, %v258, %v292
        %v295 = vsel %vm285, %v259, %v293
        %v296 = vmul.f32 %v294, %v282
        %v297 = vmul.f32 %v295, %v283
        %v298 = vld [vmem:[%s1] sm:$0xff]
        %v299 = vld [vmem:[%s1 + $0x8] sm:$0x3f]
        %vm300 = vcmp.le.f32.partialorder %v296, 0.9396926
        %vm301 = vcmp.le.f32.partialorder %v297, 0.9396926
        %v302 = vsel %vm300, 0.0, %v272
        %v303 = vsel %vm301, 0.0, %v279
        %vm304 = vcmask 113664
        %v306 = vsel %vm304, %v302, 0
        %v309 = vsel %vm304, %v303, 0
        %v312 = vsel %vm218, %v299, 0
        %314 = vmatprep.subr.mxu0 0.0
        %315 = vmatpush1.msra.mxu0 %v298
        %316 = vmatprep.subr.mxu0 0.0
        %317 = vmatpush1.msra.mxu0 %v312
        %318 = vmatprep.subr.mxu0 0.0
        %319 = vmatpush1.msra.mxu0 0.0
        %320 = vmatprep.subr.mxu0 0.0
        %321 = vmatpush1.msra.mxu0 0.0
        %322 = vmatprep.subr.mxu0 0.0
        %323 = vmatpush1.msra.mxu0 0.0
        %324 = vmatprep.subr.mxu0 0.0
        %325 = vmatpush1.msra.mxu0 0.0
        %326 = vmatprep.subr.mxu0 0.0
        %327 = vmatpush1.msra.mxu0 0.0
        %328 = vmatprep.subr.mxu0 0.0
        %329 = vmatpush1.msra.mxu0 0.0
        %330 = vmatprep.subr.mxu0 0.0
        %331 = vmatpush1.msra.mxu0 0.0
        %332 = vmatprep.subr.mxu0 0.0
        %333 = vmatpush1.msra.mxu0 0.0
        %334 = vmatprep.subr.mxu0 0.0
        %335 = vmatpush1.msra.mxu0 0.0
        %336 = vmatprep.subr.mxu0 0.0
        %337 = vmatpush1.msra.mxu0 0.0
        %338 = vmatprep.subr.mxu0 0.0
        %339 = vmatpush1.msra.mxu0 0.0
        %340 = vmatprep.subr.mxu0 0.0
        %341 = vmatpush1.msra.mxu0 0.0
        %342 = vmatprep.subr.mxu0 0.0
        %343 = vmatpush1.msra.mxu0 0.0
        %344 = vmatprep.subr.mxu0 0.0
        %345 = vmatpush1.msra.mxu0 0.0
        %346 = vmatprep.subr.mxu0 0.0
        %347 = vmatpush1.msra.mxu0 0.0
        %348 = vmatprep.subr.mxu0 0.0
        %349 = vmatpush1.msra.mxu0 0.0
        %350 = vmatprep.subr.mxu0 0.0
        %351 = vmatpush1.msra.mxu0 0.0
        %352 = vmatprep.subr.mxu0 0.0
        %353 = vmatpush1.msra.mxu0 0.0
        %354 = vmatprep.subr.mxu0 0.0
        %355 = vmatpush1.msra.mxu0 0.0
        %356 = vmatprep.subr.mxu0 0.0
        %357 = vmatpush1.msra.mxu0 0.0
        %358 = vmatprep.subr.mxu0 0.0
        %359 = vmatpush1.msra.mxu0 0.0
        %360 = vmatprep.subr.mxu0 0.0
        %361 = vmatpush1.msra.mxu0 0.0
        %362 = vmatprep.subr.mxu0 0.0
        %363 = vmatpush1.msra.mxu0 0.0
        %364 = vmatprep.subr.mxu0 0.0
        %365 = vmatpush1.msra.mxu0 0.0
        %366 = vmatprep.subr.mxu0 0.0
        %367 = vmatpush1.msra.mxu0 0.0
        %368 = vmatprep.subr.mxu0 0.0
        %369 = vmatpush1.msra.mxu0 0.0
        %370 = vmatprep.subr.mxu0 0.0
        %371 = vmatpush1.msra.mxu0 0.0
        %372 = vmatprep.subr.mxu0 0.0
        %373 = vmatpush1.msra.mxu0 0.0
        %374 = vmatprep.subr.mxu0 0.0
        %375 = vmatpush1.msra.mxu0 0.0
        %376 = vmatprep.subr.mxu0 0.0
        %377 = vmatpush1.msra.mxu0 0.0
        %378 = vmatprep.mubr.f32.mxu0 0.0
        %379 = vmatmul.mubr.f32.gmra.mrb[0].mxu0 %v306
        %v380 = vpop.f32.mrb[0].mxu0
        %v381 = vadd.f32 0.0, %v380
        %v382 = vpop.f32.mrb[0].mxu0
        %383 = vmatprep.mubr.f32.mxu0 0.0
        %384 = vmatmul.mubr.f32.gmra.mrb[0].mxu0 %v309
        %v385 = vpop.f32.mrb[0].mxu0
        %v386 = vadd.f32 0.0, %v385
        %v387 = vpop.f32.mrb[0].mxu0
        %388 = vdwg.mxu0
        %v391 = vcombine.high %v381, %v381
        %v393 = vunpack.c.l.s4 1966171168
        %v394 = vunpack.c.0.s8 %v393
        %v395 = vlaneseq
        %v396 = vshrl.u32 %v395, 7
        %v397 = vsub.s32 %v394, %v396
        %v398 = vrot.slane %v381, %v397
        %v400 = vunpack.c.l.s4 1966171168
        %v401 = vunpack.c.0.s8 %v400
        %v402 = vlaneseq
        %v403 = vshrl.u32 %v402, 7
        %v404 = vsub.s32 %v401, %v403
        %v405 = vrot.slane %v391, %v404
        %v406 = vcombine.high %v398, %v398
        %v407 = vcombine.high %v405, %v405
        %v409 = vunpack.c.l.s4 1966171168
        %v410 = vunpack.c.0.s8 %v409
        %v411 = vlaneseq
        %v412 = vshrl.u32 %v411, 7
        %v413 = vsub.s32 %v410, %v412
        %v414 = vrot.slane %v398, %v413
        %v416 = vunpack.c.l.s4 1966171168
        %v417 = vunpack.c.0.s8 %v416
        %v418 = vlaneseq
        %v419 = vshrl.u32 %v418, 7
        %v420 = vsub.s32 %v417, %v419
        %v421 = vrot.slane %v405, %v420
        %v423 = vunpack.c.l.s4 1966171168
        %v424 = vunpack.c.0.s8 %v423
        %v425 = vlaneseq
        %v426 = vshrl.u32 %v425, 7
        %v427 = vsub.s32 %v424, %v426
        %v428 = vrot.slane %v406, %v427
        %v430 = vunpack.c.l.s4 1966171168
        %v431 = vunpack.c.0.s8 %v430
        %v432 = vlaneseq
        %v433 = vshrl.u32 %v432, 7
        %v434 = vsub.s32 %v431, %v433
        %v435 = vrot.slane %v407, %v434
        %v436 = vcombine.high %v414, %v414
        %v437 = vcombine.high %v421, %v421
        %v438 = vcombine.high %v428, %v428
        %v439 = vcombine.high %v435, %v435
        %v440 = vcombine.high %v386, %v386
        %v442 = vunpack.c.l.s4 1966171168
        %v443 = vunpack.c.0.s8 %v442
        %v444 = vlaneseq
        %v445 = vshrl.u32 %v444, 7
        %v446 = vsub.s32 %v443, %v445
        %v447 = vrot.slane %v386, %v446
        %v449 = vunpack.c.l.s4 1966171168
        %v450 = vunpack.c.0.s8 %v449
        %v451 = vlaneseq
        %v452 = vshrl.u32 %v451, 7
        %v453 = vsub.s32 %v450, %v452
        %v454 = vrot.slane %v440, %v453
        %v455 = vcombine.high %v447, %v447
        %v456 = vcombine.high %v454, %v454
        %v458 = vunpack.c.l.s4 1966171168
        %v459 = vunpack.c.0.s8 %v458
        %v460 = vlaneseq
        %v461 = vshrl.u32 %v460, 7
        %v462 = vsub.s32 %v459, %v461
        %v463 = vrot.slane %v447, %v462
        %v465 = vunpack.c.l.s4 1966171168
        %v466 = vunpack.c.0.s8 %v465
        %v467 = vlaneseq
        %v468 = vshrl.u32 %v467, 7
        %v469 = vsub.s32 %v466, %v468
        %v470 = vrot.slane %v454, %v469
        %v472 = vunpack.c.l.s4 1966171168
        %v473 = vunpack.c.0.s8 %v472
        %v474 = vlaneseq
        %v475 = vshrl.u32 %v474, 7
        %v476 = vsub.s32 %v473, %v475
        %v477 = vrot.slane %v455, %v476
        %v479 = vunpack.c.l.s4 1966171168
        %v480 = vunpack.c.0.s8 %v479
        %v481 = vlaneseq
        %v482 = vshrl.u32 %v481, 7
        %v483 = vsub.s32 %v480, %v482
        %v484 = vrot.slane %v456, %v483
        %v485 = vcombine.high %v463, %v463
        %v486 = vcombine.high %v477, %v477
        %v487 = vcombine.low %v414, %v428
        %v488 = vcombine.low %v436, %v438
        %v489 = vcombine.low %v421, %v435
        %v491 = vunpack.c.l.s4 1966171168
        %v492 = vunpack.c.0.s8 %v491
        %v493 = vlaneseq
        %v494 = vshrl.u32 %v493, 7
        %v495 = vsub.s32 %v492, %v494
        %v496 = vrot.slane %v487, %v495
        %v498 = vunpack.c.l.s4 1966171168
        %v499 = vunpack.c.0.s8 %v498
        %v500 = vlaneseq
        %v501 = vshrl.u32 %v500, 7
        %v502 = vsub.s32 %v499, %v501
        %v503 = vrot.slane %v488, %v502
        %v505 = vunpack.c.l.s4 1966171168
        %v506 = vunpack.c.0.s8 %v505
        %v507 = vlaneseq
        %v508 = vshrl.u32 %v507, 7
        %v509 = vsub.s32 %v506, %v508
        %v510 = vrot.slane %v489, %v509
        %v512 = vunpack.c.l.s4 1966171168
        %v513 = vunpack.c.0.s8 %v512
        %v514 = vlaneseq
        %v515 = vshrl.u32 %v514, 7
        %v516 = vsub.s32 %v513, %v515
        %v517 = vrot.slane %v437, %v516
        %v518 = vcombine.low %v496, %v503
        %v519 = vcombine.low %v510, %v517
        %v521 = vunpack.c.l.s4 1966171168
        %v522 = vunpack.c.0.s8 %v521
        %v523 = vlaneseq
        %v524 = vshrl.u32 %v523, 7
        %v525 = vsub.s32 %v522, %v524
        %v526 = vrot.slane %v518, %v525
        %v528 = vunpack.c.l.s4 1966171168
        %v529 = vunpack.c.0.s8 %v528
        %v530 = vlaneseq
        %v531 = vshrl.u32 %v530, 7
        %v532 = vsub.s32 %v529, %v531
        %v533 = vrot.slane %v519, %v532
        %v534 = vcombine.low %v526, %v533
        %v535 = vcombine.low %v439, %v463
        %v536 = vcombine.low %v477, %v485
        %v537 = vcombine.low %v486, %v470
        %v539 = vunpack.c.l.s4 1966171168
        %v540 = vunpack.c.0.s8 %v539
        %v541 = vlaneseq
        %v542 = vshrl.u32 %v541, 7
        %v543 = vsub.s32 %v540, %v542
        %v544 = vrot.slane %v535, %v543
        %v546 = vunpack.c.l.s4 1966171168
        %v547 = vunpack.c.0.s8 %v546
        %v548 = vlaneseq
        %v549 = vshrl.u32 %v548, 7
        %v550 = vsub.s32 %v547, %v549
        %v551 = vrot.slane %v536, %v550
        %v553 = vunpack.c.l.s4 1966171168
        %v554 = vunpack.c.0.s8 %v553
        %v555 = vlaneseq
        %v556 = vshrl.u32 %v555, 7
        %v557 = vsub.s32 %v554, %v556
        %v558 = vrot.slane %v537, %v557
        %v560 = vunpack.c.l.s4 1966171168
        %v561 = vunpack.c.0.s8 %v560
        %v562 = vlaneseq
        %v563 = vshrl.u32 %v562, 7
        %v564 = vsub.s32 %v561, %v563
        %v565 = vrot.slane %v484, %v564
        %v566 = vcombine.low %v544, %v551
        %v567 = vcombine.low %v558, %v565
        %v569 = vunpack.c.l.s4 1966171168
        %v570 = vunpack.c.0.s8 %v569
        %v571 = vlaneseq
        %v572 = vshrl.u32 %v571, 7
        %v573 = vsub.s32 %v570, %v572
        %v574 = vrot.slane %v566, %v573
        %v576 = vunpack.c.l.s4 1966171168
        %v577 = vunpack.c.0.s8 %v576
        %v578 = vlaneseq
        %v579 = vshrl.u32 %v578, 7
        %v580 = vsub.s32 %v577, %v579
        %v581 = vrot.slane %v567, %v580
        %v582 = vcombine.low %v574, %v581
        %vm585 = vcmask 14336
        %v586 = vsel %vm585, %v534, 0.0
        %v587 = vrot.slane %v586, 4
        %v588 = vadd.f32 %v586, %v587
        %v589 = vrot.slane %v588, 2
        %v590 = vadd.f32 %v588, %v589
        %v591 = vrot.slane %v590, 1
        %v592 = vadd.f32 %v590, %v591
        %v593 = vsel %vm585, %v582, 0.0
        %v594 = vrot.slane %v593, 4
        %v595 = vadd.f32 %v593, %v594
        %v596 = vrot.slane %v595, 2
        %v597 = vadd.f32 %v595, %v596
        %v598 = vrot.slane %v597, 1
        %v599 = vadd.f32 %v597, %v598
        %v600 = vmul.f32 %v592, %v592
        %v601 = vmul.f32 %v599, %v599
        %vm602 = vcmp.le.f32.partialorder %v296, 0.76604444
        %vm603 = vcmp.le.f32.partialorder %v297, 0.76604444
        %vm604 = vmxor %vm602, 1
        %vm605 = vmxor %vm603, 1
        %vm606 = vmand %vm300, %vm604
        %vm607 = vmand %vm301, %vm605
        %v608 = vsel %vm606, %v272, 0.0
        %v609 = vsel %vm607, %v279, 0.0
        %v611 = vsel %vm304, %v608, 0
        %v614 = vsel %vm304, %v609, 0
        %616 = vmatprep.subr.mxu0 0.0
        %617 = vmatpush1.msra.mxu0 %v298
        %618 = vmatprep.subr.mxu0 0.0
        %619 = vmatpush1.msra.mxu0 %v312
        %620 = vmatprep.subr.mxu0 0.0
        %621 = vmatpush1.msra.mxu0 0.0
        %622 = vmatprep.subr.mxu0 0.0
        %623 = vmatpush1.msra.mxu0 0.0
        %624 = vmatprep.subr.mxu0 0.0
        %625 = vmatpush1.msra.mxu0 0.0
        %626 = vmatprep.subr.mxu0 0.0
        %627 = vmatpush1.msra.mxu0 0.0
        %628 = vmatprep.subr.mxu0 0.0
        %629 = vmatpush1.msra.mxu0 0.0
        %630 = vmatprep.subr.mxu0 0.0
        %631 = vmatpush1.msra.mxu0 0.0
        %632 = vmatprep.subr.mxu0 0.0
        %633 = vmatpush1.msra.mxu0 0.0
        %634 = vmatprep.subr.mxu0 0.0
        %635 = vmatpush1.msra.mxu0 0.0
        %636 = vmatprep.subr.mxu0 0.0
        %637 = vmatpush1.msra.mxu0 0.0
        %638 = vmatprep.subr.mxu0 0.0
        %639 = vmatpush1.msra.mxu0 0.0
        %640 = vmatprep.subr.mxu0 0.0
        %641 = vmatpush1.msra.mxu0 0.0
        %642 = vmatprep.subr.mxu0 0.0
        %643 = vmatpush1.msra.mxu0 0.0
        %644 = vmatprep.subr.mxu0 0.0
        %645 = vmatpush1.msra.mxu0 0.0
        %646 = vmatprep.subr.mxu0 0.0
        %647 = vmatpush1.msra.mxu0 0.0
        %648 = vmatprep.subr.mxu0 0.0
        %649 = vmatpush1.msra.mxu0 0.0
        %650 = vmatprep.subr.mxu0 0.0
        %651 = vmatpush1.msra.mxu0 0.0
        %652 = vmatprep.subr.mxu0 0.0
        %653 = vmatpush1.msra.mxu0 0.0
        %654 = vmatprep.subr.mxu0 0.0
        %655 = vmatpush1.msra.mxu0 0.0
        %656 = vmatprep.subr.mxu0 0.0
        %657 = vmatpush1.msra.mxu0 0.0
        %658 = vmatprep.subr.mxu0 0.0
        %659 = vmatpush1.msra.mxu0 0.0
        %660 = vmatprep.subr.mxu0 0.0
        %661 = vmatpush1.msra.mxu0 0.0
        %662 = vmatprep.subr.mxu0 0.0
        %663 = vmatpush1.msra.mxu0 0.0
        %664 = vmatprep.subr.mxu0 0.0
        %665 = vmatpush1.msra.mxu0 0.0
        %666 = vmatprep.subr.mxu0 0.0
        %667 = vmatpush1.msra.mxu0 0.0
        %668 = vmatprep.subr.mxu0 0.0
        %669 = vmatpush1.msra.mxu0 0.0
        %670 = vmatprep.subr.mxu0 0.0
        %671 = vmatpush1.msra.mxu0 0.0
        %672 = vmatprep.subr.mxu0 0.0
        %673 = vmatpush1.msra.mxu0 0.0
        %674 = vmatprep.subr.mxu0 0.0
        %675 = vmatpush1.msra.mxu0 0.0
        %676 = vmatprep.subr.mxu0 0.0
        %677 = vmatpush1.msra.mxu0 0.0
        %678 = vmatprep.subr.mxu0 0.0
        %679 = vmatpush1.msra.mxu0 0.0
        %680 = vmatprep.mubr.f32.mxu0 0.0
        %681 = vmatmul.mubr.f32.gmra.mrb[0].mxu0 %v611
        %v682 = vpop.f32.mrb[0].mxu0
        %v683 = vadd.f32 0.0, %v682
        %v684 = vpop.f32.mrb[0].mxu0
        %685 = vmatprep.mubr.f32.mxu0 0.0
        %686 = vmatmul.mubr.f32.gmra.mrb[0].mxu0 %v614
        %v687 = vpop.f32.mrb[0].mxu0
        %v688 = vadd.f32 0.0, %v687
        %v689 = vpop.f32.mrb[0].mxu0
        %690 = vdwg.mxu0
        %v693 = vcombine.high %v683, %v683
        %v695 = vunpack.c.l.s4 1966171168
        %v696 = vunpack.c.0.s8 %v695
        %v697 = vlaneseq
        %v698 = vshrl.u32 %v697, 7
        %v699 = vsub.s32 %v696, %v698
        %v700 = vrot.slane %v683, %v699
        %v702 = vunpack.c.l.s4 1966171168
        %v703 = vunpack.c.0.s8 %v702
        %v704 = vlaneseq
        %v705 = vshrl.u32 %v704, 7
        %v706 = vsub.s32 %v703, %v705
        %v707 = vrot.slane %v693, %v706
        %v708 = vcombine.high %v700, %v700
        %v709 = vcombine.high %v707, %v707
        %v711 = vunpack.c.l.s4 1966171168
        %v712 = vunpack.c.0.s8 %v711
        %v713 = vlaneseq
        %v714 = vshrl.u32 %v713, 7
        %v715 = vsub.s32 %v712, %v714
        %v716 = vrot.slane %v700, %v715
        %v718 = vunpack.c.l.s4 1966171168
        %v719 = vunpack.c.0.s8 %v718
        %v720 = vlaneseq
        %v721 = vshrl.u32 %v720, 7
        %v722 = vsub.s32 %v719, %v721
        %v723 = vrot.slane %v707, %v722
        %v725 = vunpack.c.l.s4 1966171168
        %v726 = vunpack.c.0.s8 %v725
        %v727 = vlaneseq
        %v728 = vshrl.u32 %v727, 7
        %v729 = vsub.s32 %v726, %v728
        %v730 = vrot.slane %v708, %v729
        %v732 = vunpack.c.l.s4 1966171168
        %v733 = vunpack.c.0.s8 %v732
        %v734 = vlaneseq
        %v735 = vshrl.u32 %v734, 7
        %v736 = vsub.s32 %v733, %v735
        %v737 = vrot.slane %v709, %v736
        %v738 = vcombine.high %v716, %v716
        %v739 = vcombine.high %v723, %v723
        %v740 = vcombine.high %v730, %v730
        %v741 = vcombine.high %v737, %v737
        %v742 = vcombine.high %v688, %v688
        %v744 = vunpack.c.l.s4 1966171168
        %v745 = vunpack.c.0.s8 %v744
        %v746 = vlaneseq
        %v747 = vshrl.u32 %v746, 7
        %v748 = vsub.s32 %v745, %v747
        %v749 = vrot.slane %v688, %v748
        %v751 = vunpack.c.l.s4 1966171168
        %v752 = vunpack.c.0.s8 %v751
        %v753 = vlaneseq
        %v754 = vshrl.u32 %v753, 7
        %v755 = vsub.s32 %v752, %v754
        %v756 = vrot.slane %v742, %v755
        %v757 = vcombine.high %v749, %v749
        %v758 = vcombine.high %v756, %v756
        %v760 = vunpack.c.l.s4 1966171168
        %v761 = vunpack.c.0.s8 %v760
        %v762 = vlaneseq
        %v763 = vshrl.u32 %v762, 7
        %v764 = vsub.s32 %v761, %v763
        %v765 = vrot.slane %v749, %v764
        %v767 = vunpack.c.l.s4 1966171168
        %v768 = vunpack.c.0.s8 %v767
        %v769 = vlaneseq
        %v770 = vshrl.u32 %v769, 7
        %v771 = vsub.s32 %v768, %v770
        %v772 = vrot.slane %v756, %v771
        %v774 = vunpack.c.l.s4 1966171168
        %v775 = vunpack.c.0.s8 %v774
        %v776 = vlaneseq
        %v777 = vshrl.u32 %v776, 7
        %v778 = vsub.s32 %v775, %v777
        %v779 = vrot.slane %v757, %v778
        %v781 = vunpack.c.l.s4 1966171168
        %v782 = vunpack.c.0.s8 %v781
        %v783 = vlaneseq
        %v784 = vshrl.u32 %v783, 7
        %v785 = vsub.s32 %v782, %v784
        %v786 = vrot.slane %v758, %v785
        %v787 = vcombine.high %v765, %v765
        %v788 = vcombine.high %v779, %v779
        %v789 = vcombine.low %v716, %v730
        %v790 = vcombine.low %v738, %v740
        %v791 = vcombine.low %v723, %v737
        %v793 = vunpack.c.l.s4 1966171168
        %v794 = vunpack.c.0.s8 %v793
        %v795 = vlaneseq
        %v796 = vshrl.u32 %v795, 7
        %v797 = vsub.s32 %v794, %v796
        %v798 = vrot.slane %v789, %v797
        %v800 = vunpack.c.l.s4 1966171168
        %v801 = vunpack.c.0.s8 %v800
        %v802 = vlaneseq
        %v803 = vshrl.u32 %v802, 7
        %v804 = vsub.s32 %v801, %v803
        %v805 = vrot.slane %v790, %v804
        %v807 = vunpack.c.l.s4 1966171168
        %v808 = vunpack.c.0.s8 %v807
        %v809 = vlaneseq
        %v810 = vshrl.u32 %v809, 7
        %v811 = vsub.s32 %v808, %v810
        %v812 = vrot.slane %v791, %v811
        %v814 = vunpack.c.l.s4 1966171168
        %v815 = vunpack.c.0.s8 %v814
        %v816 = vlaneseq
        %v817 = vshrl.u32 %v816, 7
        %v818 = vsub.s32 %v815, %v817
        %v819 = vrot.slane %v739, %v818
        %v820 = vcombine.low %v798, %v805
        %v821 = vcombine.low %v812, %v819
        %v823 = vunpack.c.l.s4 1966171168
        %v824 = vunpack.c.0.s8 %v823
        %v825 = vlaneseq
        %v826 = vshrl.u32 %v825, 7
        %v827 = vsub.s32 %v824, %v826
        %v828 = vrot.slane %v820, %v827
        %v830 = vunpack.c.l.s4 1966171168
        %v831 = vunpack.c.0.s8 %v830
        %v832 = vlaneseq
        %v833 = vshrl.u32 %v832, 7
        %v834 = vsub.s32 %v831, %v833
        %v835 = vrot.slane %v821, %v834
        %v836 = vcombine.low %v828, %v835
        %v837 = vcombine.low %v741, %v765
        %v838 = vcombine.low %v779, %v787
        %v839 = vcombine.low %v788, %v772
        %v841 = vunpack.c.l.s4 1966171168
        %v842 = vunpack.c.0.s8 %v841
        %v843 = vlaneseq
        %v844 = vshrl.u32 %v843, 7
        %v845 = vsub.s32 %v842, %v844
        %v846 = vrot.slane %v837, %v845
        %v848 = vunpack.c.l.s4 1966171168
        %v849 = vunpack.c.0.s8 %v848
        %v850 = vlaneseq
        %v851 = vshrl.u32 %v850, 7
        %v852 = vsub.s32 %v849, %v851
        %v853 = vrot.slane %v838, %v852
        %v855 = vunpack.c.l.s4 1966171168
        %v856 = vunpack.c.0.s8 %v855
        %v857 = vlaneseq
        %v858 = vshrl.u32 %v857, 7
        %v859 = vsub.s32 %v856, %v858
        %v860 = vrot.slane %v839, %v859
        %v862 = vunpack.c.l.s4 1966171168
        %v863 = vunpack.c.0.s8 %v862
        %v864 = vlaneseq
        %v865 = vshrl.u32 %v864, 7
        %v866 = vsub.s32 %v863, %v865
        %v867 = vrot.slane %v786, %v866
        %v868 = vcombine.low %v846, %v853
        %v869 = vcombine.low %v860, %v867
        %v871 = vunpack.c.l.s4 1966171168
        %v872 = vunpack.c.0.s8 %v871
        %v873 = vlaneseq
        %v874 = vshrl.u32 %v873, 7
        %v875 = vsub.s32 %v872, %v874
        %v876 = vrot.slane %v868, %v875
        %v878 = vunpack.c.l.s4 1966171168
        %v879 = vunpack.c.0.s8 %v878
        %v880 = vlaneseq
        %v881 = vshrl.u32 %v880, 7
        %v882 = vsub.s32 %v879, %v881
        %v883 = vrot.slane %v869, %v882
        %v884 = vcombine.low %v876, %v883
        %v887 = vsel %vm585, %v836, 0.0
        %v888 = vrot.slane %v887, 4
        %v889 = vadd.f32 %v887, %v888
        %v890 = vrot.slane %v889, 2
        %v891 = vadd.f32 %v889, %v890
        %v892 = vrot.slane %v891, 1
        %v893 = vadd.f32 %v891, %v892
        %v894 = vsel %vm585, %v884, 0.0
        %v895 = vrot.slane %v894, 4
        %v896 = vadd.f32 %v894, %v895
        %v897 = vrot.slane %v896, 2
        %v898 = vadd.f32 %v896, %v897
        %v899 = vrot.slane %v898, 1
        %v900 = vadd.f32 %v898, %v899
        %v901 = vmul.f32 %v893, %v893
        %v902 = vmul.f32 %v900, %v900
        %v903 = vadd.f32 %v600, %v901
        %v904 = vadd.f32 %v601, %v902
        %vm905 = vcmp.le.f32.partialorder %v296, 0.5
        %vm906 = vcmp.le.f32.partialorder %v297, 0.5
        %vm907 = vmxor %vm905, 1
        %vm908 = vmxor %vm906, 1
        %vm909 = vmand %vm602, %vm907
        %vm910 = vmand %vm603, %vm908
        %v911 = vsel %vm909, %v272, 0.0
        %v912 = vsel %vm910, %v279, 0.0
        %v914 = vsel %vm304, %v911, 0
        %v917 = vsel %vm304, %v912, 0
        %919 = vmatprep.subr.mxu0 0.0
        %920 = vmatpush1.msra.mxu0 %v298
        %921 = vmatprep.subr.mxu0 0.0
        %922 = vmatpush1.msra.mxu0 %v312
        %923 = vmatprep.subr.mxu0 0.0
        %924 = vmatpush1.msra.mxu0 0.0
        %925 = vmatprep.subr.mxu0 0.0
        %926 = vmatpush1.msra.mxu0 0.0
        %927 = vmatprep.subr.mxu0 0.0
        %928 = vmatpush1.msra.mxu0 0.0
        %929 = vmatprep.subr.mxu0 0.0
        %930 = vmatpush1.msra.mxu0 0.0
        %931 = vmatprep.subr.mxu0 0.0
        %932 = vmatpush1.msra.mxu0 0.0
        %933 = vmatprep.subr.mxu0 0.0
        %934 = vmatpush1.msra.mxu0 0.0
        %935 = vmatprep.subr.mxu0 0.0
        %936 = vmatpush1.msra.mxu0 0.0
        %937 = vmatprep.subr.mxu0 0.0
        %938 = vmatpush1.msra.mxu0 0.0
        %939 = vmatprep.subr.mxu0 0.0
        %940 = vmatpush1.msra.mxu0 0.0
        %941 = vmatprep.subr.mxu0 0.0
        %942 = vmatpush1.msra.mxu0 0.0
        %943 = vmatprep.subr.mxu0 0.0
        %944 = vmatpush1.msra.mxu0 0.0
        %945 = vmatprep.subr.mxu0 0.0
        %946 = vmatpush1.msra.mxu0 0.0
        %947 = vmatprep.subr.mxu0 0.0
        %948 = vmatpush1.msra.mxu0 0.0
        %949 = vmatprep.subr.mxu0 0.0
        %950 = vmatpush1.msra.mxu0 0.0
        %951 = vmatprep.subr.mxu0 0.0
        %952 = vmatpush1.msra.mxu0 0.0
        %953 = vmatprep.subr.mxu0 0.0
        %954 = vmatpush1.msra.mxu0 0.0
        %955 = vmatprep.subr.mxu0 0.0
        %956 = vmatpush1.msra.mxu0 0.0
        %957 = vmatprep.subr.mxu0 0.0
        %958 = vmatpush1.msra.mxu0 0.0
        %959 = vmatprep.subr.mxu0 0.0
        %960 = vmatpush1.msra.mxu0 0.0
        %961 = vmatprep.subr.mxu0 0.0
        %962 = vmatpush1.msra.mxu0 0.0
        %963 = vmatprep.subr.mxu0 0.0
        %964 = vmatpush1.msra.mxu0 0.0
        %965 = vmatprep.subr.mxu0 0.0
        %966 = vmatpush1.msra.mxu0 0.0
        %967 = vmatprep.subr.mxu0 0.0
        %968 = vmatpush1.msra.mxu0 0.0
        %969 = vmatprep.subr.mxu0 0.0
        %970 = vmatpush1.msra.mxu0 0.0
        %971 = vmatprep.subr.mxu0 0.0
        %972 = vmatpush1.msra.mxu0 0.0
        %973 = vmatprep.subr.mxu0 0.0
        %974 = vmatpush1.msra.mxu0 0.0
        %975 = vmatprep.subr.mxu0 0.0
        %976 = vmatpush1.msra.mxu0 0.0
        %977 = vmatprep.subr.mxu0 0.0
        %978 = vmatpush1.msra.mxu0 0.0
        %979 = vmatprep.subr.mxu0 0.0
        %980 = vmatpush1.msra.mxu0 0.0
        %981 = vmatprep.subr.mxu0 0.0
        %982 = vmatpush1.msra.mxu0 0.0
        %983 = vmatprep.mubr.f32.mxu0 0.0
        %984 = vmatmul.mubr.f32.gmra.mrb[0].mxu0 %v914
        %v985 = vpop.f32.mrb[0].mxu0
        %v986 = vadd.f32 0.0, %v985
        %v987 = vpop.f32.mrb[0].mxu0
        %988 = vmatprep.mubr.f32.mxu0 0.0
        %989 = vmatmul.mubr.f32.gmra.mrb[0].mxu0 %v917
        %v990 = vpop.f32.mrb[0].mxu0
        %v991 = vadd.f32 0.0, %v990
        %v992 = vpop.f32.mrb[0].mxu0
        %993 = vdwg.mxu0
        %v996 = vcombine.high %v986, %v986
        %v998 = vunpack.c.l.s4 1966171168
        %v999 = vunpack.c.0.s8 %v998
        %v1000 = vlaneseq
        %v1001 = vshrl.u32 %v1000, 7
        %v1002 = vsub.s32 %v999, %v1001
        %v1003 = vrot.slane %v986, %v1002
        %v1005 = vunpack.c.l.s4 1966171168
        %v1006 = vunpack.c.0.s8 %v1005
        %v1007 = vlaneseq
        %v1008 = vshrl.u32 %v1007, 7
        %v1009 = vsub.s32 %v1006, %v1008
        %v1010 = vrot.slane %v996, %v1009
        %v1011 = vcombine.high %v1003, %v1003
        %v1012 = vcombine.high %v1010, %v1010
        %v1014 = vunpack.c.l.s4 1966171168
        %v1015 = vunpack.c.0.s8 %v1014
        %v1016 = vlaneseq
        %v1017 = vshrl.u32 %v1016, 7
        %v1018 = vsub.s32 %v1015, %v1017
        %v1019 = vrot.slane %v1003, %v1018
        %v1021 = vunpack.c.l.s4 1966171168
        %v1022 = vunpack.c.0.s8 %v1021
        %v1023 = vlaneseq
        %v1024 = vshrl.u32 %v1023, 7
        %v1025 = vsub.s32 %v1022, %v1024
        %v1026 = vrot.slane %v1010, %v1025
        %v1028 = vunpack.c.l.s4 1966171168
        %v1029 = vunpack.c.0.s8 %v1028
        %v1030 = vlaneseq
        %v1031 = vshrl.u32 %v1030, 7
        %v1032 = vsub.s32 %v1029, %v1031
        %v1033 = vrot.slane %v1011, %v1032
        %v1035 = vunpack.c.l.s4 1966171168
        %v1036 = vunpack.c.0.s8 %v1035
        %v1037 = vlaneseq
        %v1038 = vshrl.u32 %v1037, 7
        %v1039 = vsub.s32 %v1036, %v1038
        %v1040 = vrot.slane %v1012, %v1039
        %v1041 = vcombine.high %v1019, %v1019
        %v1042 = vcombine.high %v1026, %v1026
        %v1043 = vcombine.high %v1033, %v1033
        %v1044 = vcombine.high %v1040, %v1040
        %v1045 = vcombine.high %v991, %v991
        %v1047 = vunpack.c.l.s4 1966171168
        %v1048 = vunpack.c.0.s8 %v1047
        %v1049 = vlaneseq
        %v1050 = vshrl.u32 %v1049, 7
        %v1051 = vsub.s32 %v1048, %v1050
        %v1052 = vrot.slane %v991, %v1051
        %v1054 = vunpack.c.l.s4 1966171168
        %v1055 = vunpack.c.0.s8 %v1054
        %v1056 = vlaneseq
        %v1057 = vshrl.u32 %v1056, 7
        %v1058 = vsub.s32 %v1055, %v1057
        %v1059 = vrot.slane %v1045, %v1058
        %v1060 = vcombine.high %v1052, %v1052
        %v1061 = vcombine.high %v1059, %v1059
        %v1063 = vunpack.c.l.s4 1966171168
        %v1064 = vunpack.c.0.s8 %v1063
        %v1065 = vlaneseq
        %v1066 = vshrl.u32 %v1065, 7
        %v1067 = vsub.s32 %v1064, %v1066
        %v1068 = vrot.slane %v1052, %v1067
        %v1070 = vunpack.c.l.s4 1966171168
        %v1071 = vunpack.c.0.s8 %v1070
        %v1072 = vlaneseq
        %v1073 = vshrl.u32 %v1072, 7
        %v1074 = vsub.s32 %v1071, %v1073
        %v1075 = vrot.slane %v1059, %v1074
        %v1077 = vunpack.c.l.s4 1966171168
        %v1078 = vunpack.c.0.s8 %v1077
        %v1079 = vlaneseq
        %v1080 = vshrl.u32 %v1079, 7
        %v1081 = vsub.s32 %v1078, %v1080
        %v1082 = vrot.slane %v1060, %v1081
        %v1084 = vunpack.c.l.s4 1966171168
        %v1085 = vunpack.c.0.s8 %v1084
        %v1086 = vlaneseq
        %v1087 = vshrl.u32 %v1086, 7
        %v1088 = vsub.s32 %v1085, %v1087
        %v1089 = vrot.slane %v1061, %v1088
        %v1090 = vcombine.high %v1068, %v1068
        %v1091 = vcombine.high %v1082, %v1082
        %v1092 = vcombine.low %v1019, %v1033
        %v1093 = vcombine.low %v1041, %v1043
        %v1094 = vcombine.low %v1026, %v1040
        %v1096 = vunpack.c.l.s4 1966171168
        %v1097 = vunpack.c.0.s8 %v1096
        %v1098 = vlaneseq
        %v1099 = vshrl.u32 %v1098, 7
        %v1100 = vsub.s32 %v1097, %v1099
        %v1101 = vrot.slane %v1092, %v1100
        %v1103 = vunpack.c.l.s4 1966171168
        %v1104 = vunpack.c.0.s8 %v1103
        %v1105 = vlaneseq
        %v1106 = vshrl.u32 %v1105, 7
        %v1107 = vsub.s32 %v1104, %v1106
        %v1108 = vrot.slane %v1093, %v1107
        %v1110 = vunpack.c.l.s4 1966171168
        %v1111 = vunpack.c.0.s8 %v1110
        %v1112 = vlaneseq
        %v1113 = vshrl.u32 %v1112, 7
        %v1114 = vsub.s32 %v1111, %v1113
        %v1115 = vrot.slane %v1094, %v1114
        %v1117 = vunpack.c.l.s4 1966171168
        %v1118 = vunpack.c.0.s8 %v1117
        %v1119 = vlaneseq
        %v1120 = vshrl.u32 %v1119, 7
        %v1121 = vsub.s32 %v1118, %v1120
        %v1122 = vrot.slane %v1042, %v1121
        %v1123 = vcombine.low %v1101, %v1108
        %v1124 = vcombine.low %v1115, %v1122
        %v1126 = vunpack.c.l.s4 1966171168
        %v1127 = vunpack.c.0.s8 %v1126
        %v1128 = vlaneseq
        %v1129 = vshrl.u32 %v1128, 7
        %v1130 = vsub.s32 %v1127, %v1129
        %v1131 = vrot.slane %v1123, %v1130
        %v1133 = vunpack.c.l.s4 1966171168
        %v1134 = vunpack.c.0.s8 %v1133
        %v1135 = vlaneseq
        %v1136 = vshrl.u32 %v1135, 7
        %v1137 = vsub.s32 %v1134, %v1136
        %v1138 = vrot.slane %v1124, %v1137
        %v1139 = vcombine.low %v1131, %v1138
        %v1140 = vcombine.low %v1044, %v1068
        %v1141 = vcombine.low %v1082, %v1090
        %v1142 = vcombine.low %v1091, %v1075
        %v1144 = vunpack.c.l.s4 1966171168
        %v1145 = vunpack.c.0.s8 %v1144
        %v1146 = vlaneseq
        %v1147 = vshrl.u32 %v1146, 7
        %v1148 = vsub.s32 %v1145, %v1147
        %v1149 = vrot.slane %v1140, %v1148
        %v1151 = vunpack.c.l.s4 1966171168
        %v1152 = vunpack.c.0.s8 %v1151
        %v1153 = vlaneseq
        %v1154 = vshrl.u32 %v1153, 7
        %v1155 = vsub.s32 %v1152, %v1154
        %v1156 = vrot.slane %v1141, %v1155
        %v1158 = vunpack.c.l.s4 1966171168
        %v1159 = vunpack.c.0.s8 %v1158
        %v1160 = vlaneseq
        %v1161 = vshrl.u32 %v1160, 7
        %v1162 = vsub.s32 %v1159, %v1161
        %v1163 = vrot.slane %v1142, %v1162
        %v1165 = vunpack.c.l.s4 1966171168
        %v1166 = vunpack.c.0.s8 %v1165
        %v1167 = vlaneseq
        %v1168 = vshrl.u32 %v1167, 7
        %v1169 = vsub.s32 %v1166, %v1168
        %v1170 = vrot.slane %v1089, %v1169
        %v1171 = vcombine.low %v1149, %v1156
        %v1172 = vcombine.low %v1163, %v1170
        %v1174 = vunpack.c.l.s4 1966171168
        %v1175 = vunpack.c.0.s8 %v1174
        %v1176 = vlaneseq
        %v1177 = vshrl.u32 %v1176, 7
        %v1178 = vsub.s32 %v1175, %v1177
        %v1179 = vrot.slane %v1171, %v1178
        %v1181 = vunpack.c.l.s4 1966171168
        %v1182 = vunpack.c.0.s8 %v1181
        %v1183 = vlaneseq
        %v1184 = vshrl.u32 %v1183, 7
        %v1185 = vsub.s32 %v1182, %v1184
        %v1186 = vrot.slane %v1172, %v1185
        %v1187 = vcombine.low %v1179, %v1186
        %v1190 = vsel %vm585, %v1139, 0.0
        %v1191 = vrot.slane %v1190, 4
        %v1192 = vadd.f32 %v1190, %v1191
        %v1193 = vrot.slane %v1192, 2
        %v1194 = vadd.f32 %v1192, %v1193
        %v1195 = vrot.slane %v1194, 1
        %v1196 = vadd.f32 %v1194, %v1195
        %v1197 = vsel %vm585, %v1187, 0.0
        %v1198 = vrot.slane %v1197, 4
        %v1199 = vadd.f32 %v1197, %v1198
        %v1200 = vrot.slane %v1199, 2
        %v1201 = vadd.f32 %v1199, %v1200
        %v1202 = vrot.slane %v1201, 1
        %v1203 = vadd.f32 %v1201, %v1202
        %v1204 = vmul.f32 %v1196, %v1196
        %v1205 = vmul.f32 %v1203, %v1203
        %v1206 = vadd.f32 %v903, %v1204
        %v1207 = vadd.f32 %v904, %v1205
        %vm1208 = vcmp.le.f32.partialorder %v296, 0.17364818
        %vm1209 = vcmp.le.f32.partialorder %v297, 0.17364818
        %vm1210 = vmxor %vm1208, 1
        %vm1211 = vmxor %vm1209, 1
        %vm1212 = vmand %vm905, %vm1210
        %vm1213 = vmand %vm906, %vm1211
        %v1214 = vsel %vm1212, %v272, 0.0
        %v1215 = vsel %vm1213, %v279, 0.0
        %v1217 = vsel %vm304, %v1214, 0
        %v1220 = vsel %vm304, %v1215, 0
        %1222 = vmatprep.subr.mxu0 0.0
        %1223 = vmatpush1.msra.mxu0 %v298
        %1224 = vmatprep.subr.mxu0 0.0
        %1225 = vmatpush1.msra.mxu0 %v312
        %1226 = vmatprep.subr.mxu0 0.0
        %1227 = vmatpush1.msra.mxu0 0.0
        %1228 = vmatprep.subr.mxu0 0.0
        %1229 = vmatpush1.msra.mxu0 0.0
        %1230 = vmatprep.subr.mxu0 0.0
        %1231 = vmatpush1.msra.mxu0 0.0
        %1232 = vmatprep.subr.mxu0 0.0
        %1233 = vmatpush1.msra.mxu0 0.0
        %1234 = vmatprep.subr.mxu0 0.0
        %1235 = vmatpush1.msra.mxu0 0.0
        %1236 = vmatprep.subr.mxu0 0.0
        %1237 = vmatpush1.msra.mxu0 0.0
        %1238 = vmatprep.subr.mxu0 0.0
        %1239 = vmatpush1.msra.mxu0 0.0
        %1240 = vmatprep.subr.mxu0 0.0
        %1241 = vmatpush1.msra.mxu0 0.0
        %1242 = vmatprep.subr.mxu0 0.0
        %1243 = vmatpush1.msra.mxu0 0.0
        %1244 = vmatprep.subr.mxu0 0.0
        %1245 = vmatpush1.msra.mxu0 0.0
        %1246 = vmatprep.subr.mxu0 0.0
        %1247 = vmatpush1.msra.mxu0 0.0
        %1248 = vmatprep.subr.mxu0 0.0
        %1249 = vmatpush1.msra.mxu0 0.0
        %1250 = vmatprep.subr.mxu0 0.0
        %1251 = vmatpush1.msra.mxu0 0.0
        %1252 = vmatprep.subr.mxu0 0.0
        %1253 = vmatpush1.msra.mxu0 0.0
        %1254 = vmatprep.subr.mxu0 0.0
        %1255 = vmatpush1.msra.mxu0 0.0
        %1256 = vmatprep.subr.mxu0 0.0
        %1257 = vmatpush1.msra.mxu0 0.0
        %1258 = vmatprep.subr.mxu0 0.0
        %1259 = vmatpush1.msra.mxu0 0.0
        %1260 = vmatprep.subr.mxu0 0.0
        %1261 = vmatpush1.msra.mxu0 0.0
        %1262 = vmatprep.subr.mxu0 0.0
        %1263 = vmatpush1.msra.mxu0 0.0
        %1264 = vmatprep.subr.mxu0 0.0
        %1265 = vmatpush1.msra.mxu0 0.0
        %1266 = vmatprep.subr.mxu0 0.0
        %1267 = vmatpush1.msra.mxu0 0.0
        %1268 = vmatprep.subr.mxu0 0.0
        %1269 = vmatpush1.msra.mxu0 0.0
        %1270 = vmatprep.subr.mxu0 0.0
        %1271 = vmatpush1.msra.mxu0 0.0
        %1272 = vmatprep.subr.mxu0 0.0
        %1273 = vmatpush1.msra.mxu0 0.0
        %1274 = vmatprep.subr.mxu0 0.0
        %1275 = vmatpush1.msra.mxu0 0.0
        %1276 = vmatprep.subr.mxu0 0.0
        %1277 = vmatpush1.msra.mxu0 0.0
        %1278 = vmatprep.subr.mxu0 0.0
        %1279 = vmatpush1.msra.mxu0 0.0
        %1280 = vmatprep.subr.mxu0 0.0
        %1281 = vmatpush1.msra.mxu0 0.0
        %1282 = vmatprep.subr.mxu0 0.0
        %1283 = vmatpush1.msra.mxu0 0.0
        %1284 = vmatprep.subr.mxu0 0.0
        %1285 = vmatpush1.msra.mxu0 0.0
        %1286 = vmatprep.mubr.f32.mxu0 0.0
        %1287 = vmatmul.mubr.f32.gmra.mrb[0].mxu0 %v1217
        %v1288 = vpop.f32.mrb[0].mxu0
        %v1289 = vadd.f32 0.0, %v1288
        %v1290 = vpop.f32.mrb[0].mxu0
        %1291 = vmatprep.mubr.f32.mxu0 0.0
        %1292 = vmatmul.mubr.f32.gmra.mrb[0].mxu0 %v1220
        %v1293 = vpop.f32.mrb[0].mxu0
        %v1294 = vadd.f32 0.0, %v1293
        %v1295 = vpop.f32.mrb[0].mxu0
        %1296 = vdwg.mxu0
        %v1299 = vcombine.high %v1289, %v1289
        %v1301 = vunpack.c.l.s4 1966171168
        %v1302 = vunpack.c.0.s8 %v1301
        %v1303 = vlaneseq
        %v1304 = vshrl.u32 %v1303, 7
        %v1305 = vsub.s32 %v1302, %v1304
        %v1306 = vrot.slane %v1289, %v1305
        %v1308 = vunpack.c.l.s4 1966171168
        %v1309 = vunpack.c.0.s8 %v1308
        %v1310 = vlaneseq
        %v1311 = vshrl.u32 %v1310, 7
        %v1312 = vsub.s32 %v1309, %v1311
        %v1313 = vrot.slane %v1299, %v1312
        %v1314 = vcombine.high %v1306, %v1306
        %v1315 = vcombine.high %v1313, %v1313
        %v1317 = vunpack.c.l.s4 1966171168
        %v1318 = vunpack.c.0.s8 %v1317
        %v1319 = vlaneseq
        %v1320 = vshrl.u32 %v1319, 7
        %v1321 = vsub.s32 %v1318, %v1320
        %v1322 = vrot.slane %v1306, %v1321
        %v1324 = vunpack.c.l.s4 1966171168
        %v1325 = vunpack.c.0.s8 %v1324
        %v1326 = vlaneseq
        %v1327 = vshrl.u32 %v1326, 7
        %v1328 = vsub.s32 %v1325, %v1327
        %v1329 = vrot.slane %v1313, %v1328
        %v1331 = vunpack.c.l.s4 1966171168
        %v1332 = vunpack.c.0.s8 %v1331
        %v1333 = vlaneseq
        %v1334 = vshrl.u32 %v1333, 7
        %v1335 = vsub.s32 %v1332, %v1334
        %v1336 = vrot.slane %v1314, %v1335
        %v1338 = vunpack.c.l.s4 1966171168
        %v1339 = vunpack.c.0.s8 %v1338
        %v1340 = vlaneseq
        %v1341 = vshrl.u32 %v1340, 7
        %v1342 = vsub.s32 %v1339, %v1341
        %v1343 = vrot.slane %v1315, %v1342
        %v1344 = vcombine.high %v1322, %v1322
        %v1345 = vcombine.high %v1329, %v1329
        %v1346 = vcombine.high %v1336, %v1336
        %v1347 = vcombine.high %v1343, %v1343
        %v1348 = vcombine.high %v1294, %v1294
        %v1350 = vunpack.c.l.s4 1966171168
        %v1351 = vunpack.c.0.s8 %v1350
        %v1352 = vlaneseq
        %v1353 = vshrl.u32 %v1352, 7
        %v1354 = vsub.s32 %v1351, %v1353
        %v1355 = vrot.slane %v1294, %v1354
        %v1357 = vunpack.c.l.s4 1966171168
        %v1358 = vunpack.c.0.s8 %v1357
        %v1359 = vlaneseq
        %v1360 = vshrl.u32 %v1359, 7
        %v1361 = vsub.s32 %v1358, %v1360
        %v1362 = vrot.slane %v1348, %v1361
        %v1363 = vcombine.high %v1355, %v1355
        %v1364 = vcombine.high %v1362, %v1362
        %v1366 = vunpack.c.l.s4 1966171168
        %v1367 = vunpack.c.0.s8 %v1366
        %v1368 = vlaneseq
        %v1369 = vshrl.u32 %v1368, 7
        %v1370 = vsub.s32 %v1367, %v1369
        %v1371 = vrot.slane %v1355, %v1370
        %v1373 = vunpack.c.l.s4 1966171168
        %v1374 = vunpack.c.0.s8 %v1373
        %v1375 = vlaneseq
        %v1376 = vshrl.u32 %v1375, 7
        %v1377 = vsub.s32 %v1374, %v1376
        %v1378 = vrot.slane %v1362, %v1377
        %v1380 = vunpack.c.l.s4 1966171168
        %v1381 = vunpack.c.0.s8 %v1380
        %v1382 = vlaneseq
        %v1383 = vshrl.u32 %v1382, 7
        %v1384 = vsub.s32 %v1381, %v1383
        %v1385 = vrot.slane %v1363, %v1384
        %v1387 = vunpack.c.l.s4 1966171168
        %v1388 = vunpack.c.0.s8 %v1387
        %v1389 = vlaneseq
        %v1390 = vshrl.u32 %v1389, 7
        %v1391 = vsub.s32 %v1388, %v1390
        %v1392 = vrot.slane %v1364, %v1391
        %v1393 = vcombine.high %v1371, %v1371
        %v1394 = vcombine.high %v1385, %v1385
        %v1395 = vcombine.low %v1322, %v1336
        %v1396 = vcombine.low %v1344, %v1346
        %v1397 = vcombine.low %v1329, %v1343
        %v1399 = vunpack.c.l.s4 1966171168
        %v1400 = vunpack.c.0.s8 %v1399
        %v1401 = vlaneseq
        %v1402 = vshrl.u32 %v1401, 7
        %v1403 = vsub.s32 %v1400, %v1402
        %v1404 = vrot.slane %v1395, %v1403
        %v1406 = vunpack.c.l.s4 1966171168
        %v1407 = vunpack.c.0.s8 %v1406
        %v1408 = vlaneseq
        %v1409 = vshrl.u32 %v1408, 7
        %v1410 = vsub.s32 %v1407, %v1409
        %v1411 = vrot.slane %v1396, %v1410
        %v1413 = vunpack.c.l.s4 1966171168
        %v1414 = vunpack.c.0.s8 %v1413
        %v1415 = vlaneseq
        %v1416 = vshrl.u32 %v1415, 7
        %v1417 = vsub.s32 %v1414, %v1416
        %v1418 = vrot.slane %v1397, %v1417
        %v1420 = vunpack.c.l.s4 1966171168
        %v1421 = vunpack.c.0.s8 %v1420
        %v1422 = vlaneseq
        %v1423 = vshrl.u32 %v1422, 7
        %v1424 = vsub.s32 %v1421, %v1423
        %v1425 = vrot.slane %v1345, %v1424
        %v1426 = vcombine.low %v1404, %v1411
        %v1427 = vcombine.low %v1418, %v1425
        %v1429 = vunpack.c.l.s4 1966171168
        %v1430 = vunpack.c.0.s8 %v1429
        %v1431 = vlaneseq
        %v1432 = vshrl.u32 %v1431, 7
        %v1433 = vsub.s32 %v1430, %v1432
        %v1434 = vrot.slane %v1426, %v1433
        %v1436 = vunpack.c.l.s4 1966171168
        %v1437 = vunpack.c.0.s8 %v1436
        %v1438 = vlaneseq
        %v1439 = vshrl.u32 %v1438, 7
        %v1440 = vsub.s32 %v1437, %v1439
        %v1441 = vrot.slane %v1427, %v1440
        %v1442 = vcombine.low %v1434, %v1441
        %v1443 = vcombine.low %v1347, %v1371
        %v1444 = vcombine.low %v1385, %v1393
        %v1445 = vcombine.low %v1394, %v1378
        %v1447 = vunpack.c.l.s4 1966171168
        %v1448 = vunpack.c.0.s8 %v1447
        %v1449 = vlaneseq
        %v1450 = vshrl.u32 %v1449, 7
        %v1451 = vsub.s32 %v1448, %v1450
        %v1452 = vrot.slane %v1443, %v1451
        %v1454 = vunpack.c.l.s4 1966171168
        %v1455 = vunpack.c.0.s8 %v1454
        %v1456 = vlaneseq
        %v1457 = vshrl.u32 %v1456, 7
        %v1458 = vsub.s32 %v1455, %v1457
        %v1459 = vrot.slane %v1444, %v1458
        %v1461 = vunpack.c.l.s4 1966171168
        %v1462 = vunpack.c.0.s8 %v1461
        %v1463 = vlaneseq
        %v1464 = vshrl.u32 %v1463, 7
        %v1465 = vsub.s32 %v1462, %v1464
        %v1466 = vrot.slane %v1445, %v1465
        %v1468 = vunpack.c.l.s4 1966171168
        %v1469 = vunpack.c.0.s8 %v1468
        %v1470 = vlaneseq
        %v1471 = vshrl.u32 %v1470, 7
        %v1472 = vsub.s32 %v1469, %v1471
        %v1473 = vrot.slane %v1392, %v1472
        %v1474 = vcombine.low %v1452, %v1459
        %v1475 = vcombine.low %v1466, %v1473
        %v1477 = vunpack.c.l.s4 1966171168
        %v1478 = vunpack.c.0.s8 %v1477
        %v1479 = vlaneseq
        %v1480 = vshrl.u32 %v1479, 7
        %v1481 = vsub.s32 %v1478, %v1480
        %v1482 = vrot.slane %v1474, %v1481
        %v1484 = vunpack.c.l.s4 1966171168
        %v1485 = vunpack.c.0.s8 %v1484
        %v1486 = vlaneseq
        %v1487 = vshrl.u32 %v1486, 7
        %v1488 = vsub.s32 %v1485, %v1487
        %v1489 = vrot.slane %v1475, %v1488
        %v1490 = vcombine.low %v1482, %v1489
        %v1493 = vsel %vm585, %v1442, 0.0
        %v1494 = vrot.slane %v1493, 4
        %v1495 = vadd.f32 %v1493, %v1494
        %v1496 = vrot.slane %v1495, 2
        %v1497 = vadd.f32 %v1495, %v1496
        %v1498 = vrot.slane %v1497, 1
        %v1499 = vadd.f32 %v1497, %v1498
        %v1500 = vsel %vm585, %v1490, 0.0
        %v1501 = vrot.slane %v1500, 4
        %v1502 = vadd.f32 %v1500, %v1501
        %v1503 = vrot.slane %v1502, 2
        %v1504 = vadd.f32 %v1502, %v1503
        %v1505 = vrot.slane %v1504, 1
        %v1506 = vadd.f32 %v1504, %v1505
        %v1507 = vmul.f32 %v1499, %v1499
        %v1508 = vmul.f32 %v1506, %v1506
        %v1509 = vadd.f32 %v1206, %v1507
        %v1510 = vadd.f32 %v1207, %v1508
        %vm1511 = vcmp.le.f32.partialorder %v296, -0.17364818
        %vm1512 = vcmp.le.f32.partialorder %v297, -0.17364818
        %vm1513 = vmxor %vm1511, 1
        %vm1514 = vmxor %vm1512, 1
        %vm1515 = vmand %vm1208, %vm1513
        %vm1516 = vmand %vm1209, %vm1514
        %v1517 = vsel %vm1515, %v272, 0.0
        %v1518 = vsel %vm1516, %v279, 0.0
        %v1520 = vsel %vm304, %v1517, 0
        %v1523 = vsel %vm304, %v1518, 0
        %1525 = vmatprep.subr.mxu0 0.0
        %1526 = vmatpush1.msra.mxu0 %v298
        %1527 = vmatprep.subr.mxu0 0.0
        %1528 = vmatpush1.msra.mxu0 %v312
        %1529 = vmatprep.subr.mxu0 0.0
        %1530 = vmatpush1.msra.mxu0 0.0
        %1531 = vmatprep.subr.mxu0 0.0
        %1532 = vmatpush1.msra.mxu0 0.0
        %1533 = vmatprep.subr.mxu0 0.0
        %1534 = vmatpush1.msra.mxu0 0.0
        %1535 = vmatprep.subr.mxu0 0.0
        %1536 = vmatpush1.msra.mxu0 0.0
        %1537 = vmatprep.subr.mxu0 0.0
        %1538 = vmatpush1.msra.mxu0 0.0
        %1539 = vmatprep.subr.mxu0 0.0
        %1540 = vmatpush1.msra.mxu0 0.0
        %1541 = vmatprep.subr.mxu0 0.0
        %1542 = vmatpush1.msra.mxu0 0.0
        %1543 = vmatprep.subr.mxu0 0.0
        %1544 = vmatpush1.msra.mxu0 0.0
        %1545 = vmatprep.subr.mxu0 0.0
        %1546 = vmatpush1.msra.mxu0 0.0
        %1547 = vmatprep.subr.mxu0 0.0
        %1548 = vmatpush1.msra.mxu0 0.0
        %1549 = vmatprep.subr.mxu0 0.0
        %1550 = vmatpush1.msra.mxu0 0.0
        %1551 = vmatprep.subr.mxu0 0.0
        %1552 = vmatpush1.msra.mxu0 0.0
        %1553 = vmatprep.subr.mxu0 0.0
        %1554 = vmatpush1.msra.mxu0 0.0
        %1555 = vmatprep.subr.mxu0 0.0
        %1556 = vmatpush1.msra.mxu0 0.0
        %1557 = vmatprep.subr.mxu0 0.0
        %1558 = vmatpush1.msra.mxu0 0.0
        %1559 = vmatprep.subr.mxu0 0.0
        %1560 = vmatpush1.msra.mxu0 0.0
        %1561 = vmatprep.subr.mxu0 0.0
        %1562 = vmatpush1.msra.mxu0 0.0
        %1563 = vmatprep.subr.mxu0 0.0
        %1564 = vmatpush1.msra.mxu0 0.0
        %1565 = vmatprep.subr.mxu0 0.0
        %1566 = vmatpush1.msra.mxu0 0.0
        %1567 = vmatprep.subr.mxu0 0.0
        %1568 = vmatpush1.msra.mxu0 0.0
        %1569 = vmatprep.subr.mxu0 0.0
        %1570 = vmatpush1.msra.mxu0 0.0
        %1571 = vmatprep.subr.mxu0 0.0
        %1572 = vmatpush1.msra.mxu0 0.0
        %1573 = vmatprep.subr.mxu0 0.0
        %1574 = vmatpush1.msra.mxu0 0.0
        %1575 = vmatprep.subr.mxu0 0.0
        %1576 = vmatpush1.msra.mxu0 0.0
        %1577 = vmatprep.subr.mxu0 0.0
        %1578 = vmatpush1.msra.mxu0 0.0
        %1579 = vmatprep.subr.mxu0 0.0
        %1580 = vmatpush1.msra.mxu0 0.0
        %1581 = vmatprep.subr.mxu0 0.0
        %1582 = vmatpush1.msra.mxu0 0.0
        %1583 = vmatprep.subr.mxu0 0.0
        %1584 = vmatpush1.msra.mxu0 0.0
        %1585 = vmatprep.subr.mxu0 0.0
        %1586 = vmatpush1.msra.mxu0 0.0
        %1587 = vmatprep.subr.mxu0 0.0
        %1588 = vmatpush1.msra.mxu0 0.0
        %1589 = vmatprep.mubr.f32.mxu0 0.0
        %1590 = vmatmul.mubr.f32.gmra.mrb[0].mxu0 %v1520
        %v1591 = vpop.f32.mrb[0].mxu0
        %v1592 = vadd.f32 0.0, %v1591
        %v1593 = vpop.f32.mrb[0].mxu0
        %1594 = vmatprep.mubr.f32.mxu0 0.0
        %1595 = vmatmul.mubr.f32.gmra.mrb[0].mxu0 %v1523
        %v1596 = vpop.f32.mrb[0].mxu0
        %v1597 = vadd.f32 0.0, %v1596
        %v1598 = vpop.f32.mrb[0].mxu0
        %1599 = vdwg.mxu0
        %v1602 = vcombine.high %v1592, %v1592
        %v1604 = vunpack.c.l.s4 1966171168
        %v1605 = vunpack.c.0.s8 %v1604
        %v1606 = vlaneseq
        %v1607 = vshrl.u32 %v1606, 7
        %v1608 = vsub.s32 %v1605, %v1607
        %v1609 = vrot.slane %v1592, %v1608
        %v1611 = vunpack.c.l.s4 1966171168
        %v1612 = vunpack.c.0.s8 %v1611
        %v1613 = vlaneseq
        %v1614 = vshrl.u32 %v1613, 7
        %v1615 = vsub.s32 %v1612, %v1614
        %v1616 = vrot.slane %v1602, %v1615
        %v1617 = vcombine.high %v1609, %v1609
        %v1618 = vcombine.high %v1616, %v1616
        %v1620 = vunpack.c.l.s4 1966171168
        %v1621 = vunpack.c.0.s8 %v1620
        %v1622 = vlaneseq
        %v1623 = vshrl.u32 %v1622, 7
        %v1624 = vsub.s32 %v1621, %v1623
        %v1625 = vrot.slane %v1609, %v1624
        %v1627 = vunpack.c.l.s4 1966171168
        %v1628 = vunpack.c.0.s8 %v1627
        %v1629 = vlaneseq
        %v1630 = vshrl.u32 %v1629, 7
        %v1631 = vsub.s32 %v1628, %v1630
        %v1632 = vrot.slane %v1616, %v1631
        %v1634 = vunpack.c.l.s4 1966171168
        %v1635 = vunpack.c.0.s8 %v1634
        %v1636 = vlaneseq
        %v1637 = vshrl.u32 %v1636, 7
        %v1638 = vsub.s32 %v1635, %v1637
        %v1639 = vrot.slane %v1617, %v1638
        %v1641 = vunpack.c.l.s4 1966171168
        %v1642 = vunpack.c.0.s8 %v1641
        %v1643 = vlaneseq
        %v1644 = vshrl.u32 %v1643, 7
        %v1645 = vsub.s32 %v1642, %v1644
        %v1646 = vrot.slane %v1618, %v1645
        %v1647 = vcombine.high %v1625, %v1625
        %v1648 = vcombine.high %v1632, %v1632
        %v1649 = vcombine.high %v1639, %v1639
        %v1650 = vcombine.high %v1646, %v1646
        %v1651 = vcombine.high %v1597, %v1597
        %v1653 = vunpack.c.l.s4 1966171168
        %v1654 = vunpack.c.0.s8 %v1653
        %v1655 = vlaneseq
        %v1656 = vshrl.u32 %v1655, 7
        %v1657 = vsub.s32 %v1654, %v1656
        %v1658 = vrot.slane %v1597, %v1657
        %v1660 = vunpack.c.l.s4 1966171168
        %v1661 = vunpack.c.0.s8 %v1660
        %v1662 = vlaneseq
        %v1663 = vshrl.u32 %v1662, 7
        %v1664 = vsub.s32 %v1661, %v1663
        %v1665 = vrot.slane %v1651, %v1664
        %v1666 = vcombine.high %v1658, %v1658
        %v1667 = vcombine.high %v1665, %v1665
        %v1669 = vunpack.c.l.s4 1966171168
        %v1670 = vunpack.c.0.s8 %v1669
        %v1671 = vlaneseq
        %v1672 = vshrl.u32 %v1671, 7
        %v1673 = vsub.s32 %v1670, %v1672
        %v1674 = vrot.slane %v1658, %v1673
        %v1676 = vunpack.c.l.s4 1966171168
        %v1677 = vunpack.c.0.s8 %v1676
        %v1678 = vlaneseq
        %v1679 = vshrl.u32 %v1678, 7
        %v1680 = vsub.s32 %v1677, %v1679
        %v1681 = vrot.slane %v1665, %v1680
        %v1683 = vunpack.c.l.s4 1966171168
        %v1684 = vunpack.c.0.s8 %v1683
        %v1685 = vlaneseq
        %v1686 = vshrl.u32 %v1685, 7
        %v1687 = vsub.s32 %v1684, %v1686
        %v1688 = vrot.slane %v1666, %v1687
        %v1690 = vunpack.c.l.s4 1966171168
        %v1691 = vunpack.c.0.s8 %v1690
        %v1692 = vlaneseq
        %v1693 = vshrl.u32 %v1692, 7
        %v1694 = vsub.s32 %v1691, %v1693
        %v1695 = vrot.slane %v1667, %v1694
        %v1696 = vcombine.high %v1674, %v1674
        %v1697 = vcombine.high %v1688, %v1688
        %v1698 = vcombine.low %v1625, %v1639
        %v1699 = vcombine.low %v1647, %v1649
        %v1700 = vcombine.low %v1632, %v1646
        %v1702 = vunpack.c.l.s4 1966171168
        %v1703 = vunpack.c.0.s8 %v1702
        %v1704 = vlaneseq
        %v1705 = vshrl.u32 %v1704, 7
        %v1706 = vsub.s32 %v1703, %v1705
        %v1707 = vrot.slane %v1698, %v1706
        %v1709 = vunpack.c.l.s4 1966171168
        %v1710 = vunpack.c.0.s8 %v1709
        %v1711 = vlaneseq
        %v1712 = vshrl.u32 %v1711, 7
        %v1713 = vsub.s32 %v1710, %v1712
        %v1714 = vrot.slane %v1699, %v1713
        %v1716 = vunpack.c.l.s4 1966171168
        %v1717 = vunpack.c.0.s8 %v1716
        %v1718 = vlaneseq
        %v1719 = vshrl.u32 %v1718, 7
        %v1720 = vsub.s32 %v1717, %v1719
        %v1721 = vrot.slane %v1700, %v1720
        %v1723 = vunpack.c.l.s4 1966171168
        %v1724 = vunpack.c.0.s8 %v1723
        %v1725 = vlaneseq
        %v1726 = vshrl.u32 %v1725, 7
        %v1727 = vsub.s32 %v1724, %v1726
        %v1728 = vrot.slane %v1648, %v1727
        %v1729 = vcombine.low %v1707, %v1714
        %v1730 = vcombine.low %v1721, %v1728
        %v1732 = vunpack.c.l.s4 1966171168
        %v1733 = vunpack.c.0.s8 %v1732
        %v1734 = vlaneseq
        %v1735 = vshrl.u32 %v1734, 7
        %v1736 = vsub.s32 %v1733, %v1735
        %v1737 = vrot.slane %v1729, %v1736
        %v1739 = vunpack.c.l.s4 1966171168
        %v1740 = vunpack.c.0.s8 %v1739
        %v1741 = vlaneseq
        %v1742 = vshrl.u32 %v1741, 7
        %v1743 = vsub.s32 %v1740, %v1742
        %v1744 = vrot.slane %v1730, %v1743
        %v1745 = vcombine.low %v1737, %v1744
        %v1746 = vcombine.low %v1650, %v1674
        %v1747 = vcombine.low %v1688, %v1696
        %v1748 = vcombine.low %v1697, %v1681
        %v1750 = vunpack.c.l.s4 1966171168
        %v1751 = vunpack.c.0.s8 %v1750
        %v1752 = vlaneseq
        %v1753 = vshrl.u32 %v1752, 7
        %v1754 = vsub.s32 %v1751, %v1753
        %v1755 = vrot.slane %v1746, %v1754
        %v1757 = vunpack.c.l.s4 1966171168
        %v1758 = vunpack.c.0.s8 %v1757
        %v1759 = vlaneseq
        %v1760 = vshrl.u32 %v1759, 7
        %v1761 = vsub.s32 %v1758, %v1760
        %v1762 = vrot.slane %v1747, %v1761
        %v1764 = vunpack.c.l.s4 1966171168
        %v1765 = vunpack.c.0.s8 %v1764
        %v1766 = vlaneseq
        %v1767 = vshrl.u32 %v1766, 7
        %v1768 = vsub.s32 %v1765, %v1767
        %v1769 = vrot.slane %v1748, %v1768
        %v1771 = vunpack.c.l.s4 1966171168
        %v1772 = vunpack.c.0.s8 %v1771
        %v1773 = vlaneseq
        %v1774 = vshrl.u32 %v1773, 7
        %v1775 = vsub.s32 %v1772, %v1774
        %v1776 = vrot.slane %v1695, %v1775
        %v1777 = vcombine.low %v1755, %v1762
        %v1778 = vcombine.low %v1769, %v1776
        %v1780 = vunpack.c.l.s4 1966171168
        %v1781 = vunpack.c.0.s8 %v1780
        %v1782 = vlaneseq
        %v1783 = vshrl.u32 %v1782, 7
        %v1784 = vsub.s32 %v1781, %v1783
        %v1785 = vrot.slane %v1777, %v1784
        %v1787 = vunpack.c.l.s4 1966171168
        %v1788 = vunpack.c.0.s8 %v1787
        %v1789 = vlaneseq
        %v1790 = vshrl.u32 %v1789, 7
        %v1791 = vsub.s32 %v1788, %v1790
        %v1792 = vrot.slane %v1778, %v1791
        %v1793 = vcombine.low %v1785, %v1792
        %v1796 = vsel %vm585, %v1745, 0.0
        %v1797 = vrot.slane %v1796, 4
        %v1798 = vadd.f32 %v1796, %v1797
        %v1799 = vrot.slane %v1798, 2
        %v1800 = vadd.f32 %v1798, %v1799
        %v1801 = vrot.slane %v1800, 1
        %v1802 = vadd.f32 %v1800, %v1801
        %v1803 = vsel %vm585, %v1793, 0.0
        %v1804 = vrot.slane %v1803, 4
        %v1805 = vadd.f32 %v1803, %v1804
        %v1806 = vrot.slane %v1805, 2
        %v1807 = vadd.f32 %v1805, %v1806
        %v1808 = vrot.slane %v1807, 1
        %v1809 = vadd.f32 %v1807, %v1808
        %v1810 = vmul.f32 %v1802, %v1802
        %v1811 = vmul.f32 %v1809, %v1809
        %v1812 = vadd.f32 %v1509, %v1810
        %v1813 = vadd.f32 %v1510, %v1811
        %vm1814 = vcmp.le.f32.partialorder %v296, -0.5
        %vm1815 = vcmp.le.f32.partialorder %v297, -0.5
        %vm1816 = vmxor %vm1814, 1
        %vm1817 = vmxor %vm1815, 1
        %vm1818 = vmand %vm1511, %vm1816
        %vm1819 = vmand %vm1512, %vm1817
        %v1820 = vsel %vm1818, %v272, 0.0
        %v1821 = vsel %vm1819, %v279, 0.0
        %v1823 = vsel %vm304, %v1820, 0
        %v1826 = vsel %vm304, %v1821, 0
        %1828 = vmatprep.subr.mxu0 0.0
        %1829 = vmatpush1.msra.mxu0 %v298
        %1830 = vmatprep.subr.mxu0 0.0
        %1831 = vmatpush1.msra.mxu0 %v312
        %1832 = vmatprep.subr.mxu0 0.0
        %1833 = vmatpush1.msra.mxu0 0.0
        %1834 = vmatprep.subr.mxu0 0.0
        %1835 = vmatpush1.msra.mxu0 0.0
        %1836 = vmatprep.subr.mxu0 0.0
        %1837 = vmatpush1.msra.mxu0 0.0
        %1838 = vmatprep.subr.mxu0 0.0
        %1839 = vmatpush1.msra.mxu0 0.0
        %1840 = vmatprep.subr.mxu0 0.0
        %1841 = vmatpush1.msra.mxu0 0.0
        %1842 = vmatprep.subr.mxu0 0.0
        %1843 = vmatpush1.msra.mxu0 0.0
        %1844 = vmatprep.subr.mxu0 0.0
        %1845 = vmatpush1.msra.mxu0 0.0
        %1846 = vmatprep.subr.mxu0 0.0
        %1847 = vmatpush1.msra.mxu0 0.0
        %1848 = vmatprep.subr.mxu0 0.0
        %1849 = vmatpush1.msra.mxu0 0.0
        %1850 = vmatprep.subr.mxu0 0.0
        %1851 = vmatpush1.msra.mxu0 0.0
        %1852 = vmatprep.subr.mxu0 0.0
        %1853 = vmatpush1.msra.mxu0 0.0
        %1854 = vmatprep.subr.mxu0 0.0
        %1855 = vmatpush1.msra.mxu0 0.0
        %1856 = vmatprep.subr.mxu0 0.0
        %1857 = vmatpush1.msra.mxu0 0.0
        %1858 = vmatprep.subr.mxu0 0.0
        %1859 = vmatpush1.msra.mxu0 0.0
        %1860 = vmatprep.subr.mxu0 0.0
        %1861 = vmatpush1.msra.mxu0 0.0
        %1862 = vmatprep.subr.mxu0 0.0
        %1863 = vmatpush1.msra.mxu0 0.0
        %1864 = vmatprep.subr.mxu0 0.0
        %1865 = vmatpush1.msra.mxu0 0.0
        %1866 = vmatprep.subr.mxu0 0.0
        %1867 = vmatpush1.msra.mxu0 0.0
        %1868 = vmatprep.subr.mxu0 0.0
        %1869 = vmatpush1.msra.mxu0 0.0
        %1870 = vmatprep.subr.mxu0 0.0
        %1871 = vmatpush1.msra.mxu0 0.0
        %1872 = vmatprep.subr.mxu0 0.0
        %1873 = vmatpush1.msra.mxu0 0.0
        %1874 = vmatprep.subr.mxu0 0.0
        %1875 = vmatpush1.msra.mxu0 0.0
        %1876 = vmatprep.subr.mxu0 0.0
        %1877 = vmatpush1.msra.mxu0 0.0
        %1878 = vmatprep.subr.mxu0 0.0
        %1879 = vmatpush1.msra.mxu0 0.0
        %1880 = vmatprep.subr.mxu0 0.0
        %1881 = vmatpush1.msra.mxu0 0.0
        %1882 = vmatprep.subr.mxu0 0.0
        %1883 = vmatpush1.msra.mxu0 0.0
        %1884 = vmatprep.subr.mxu0 0.0
        %1885 = vmatpush1.msra.mxu0 0.0
        %1886 = vmatprep.subr.mxu0 0.0
        %1887 = vmatpush1.msra.mxu0 0.0
        %1888 = vmatprep.subr.mxu0 0.0
        %1889 = vmatpush1.msra.mxu0 0.0
        %1890 = vmatprep.subr.mxu0 0.0
        %1891 = vmatpush1.msra.mxu0 0.0
        %1892 = vmatprep.mubr.f32.mxu0 0.0
        %1893 = vmatmul.mubr.f32.gmra.mrb[0].mxu0 %v1823
        %v1894 = vpop.f32.mrb[0].mxu0
        %v1895 = vadd.f32 0.0, %v1894
        %v1896 = vpop.f32.mrb[0].mxu0
        %1897 = vmatprep.mubr.f32.mxu0 0.0
        %1898 = vmatmul.mubr.f32.gmra.mrb[0].mxu0 %v1826
        %v1899 = vpop.f32.mrb[0].mxu0
        %v1900 = vadd.f32 0.0, %v1899
        %v1901 = vpop.f32.mrb[0].mxu0
        %1902 = vdwg.mxu0
        %v1905 = vcombine.high %v1895, %v1895
        %v1907 = vunpack.c.l.s4 1966171168
        %v1908 = vunpack.c.0.s8 %v1907
        %v1909 = vlaneseq
        %v1910 = vshrl.u32 %v1909, 7
        %v1911 = vsub.s32 %v1908, %v1910
        %v1912 = vrot.slane %v1895, %v1911
        %v1914 = vunpack.c.l.s4 1966171168
        %v1915 = vunpack.c.0.s8 %v1914
        %v1916 = vlaneseq
        %v1917 = vshrl.u32 %v1916, 7
        %v1918 = vsub.s32 %v1915, %v1917
        %v1919 = vrot.slane %v1905, %v1918
        %v1920 = vcombine.high %v1912, %v1912
        %v1921 = vcombine.high %v1919, %v1919
        %v1923 = vunpack.c.l.s4 1966171168
        %v1924 = vunpack.c.0.s8 %v1923
        %v1925 = vlaneseq
        %v1926 = vshrl.u32 %v1925, 7
        %v1927 = vsub.s32 %v1924, %v1926
        %v1928 = vrot.slane %v1912, %v1927
        %v1930 = vunpack.c.l.s4 1966171168
        %v1931 = vunpack.c.0.s8 %v1930
        %v1932 = vlaneseq
        %v1933 = vshrl.u32 %v1932, 7
        %v1934 = vsub.s32 %v1931, %v1933
        %v1935 = vrot.slane %v1919, %v1934
        %v1937 = vunpack.c.l.s4 1966171168
        %v1938 = vunpack.c.0.s8 %v1937
        %v1939 = vlaneseq
        %v1940 = vshrl.u32 %v1939, 7
        %v1941 = vsub.s32 %v1938, %v1940
        %v1942 = vrot.slane %v1920, %v1941
        %v1944 = vunpack.c.l.s4 1966171168
        %v1945 = vunpack.c.0.s8 %v1944
        %v1946 = vlaneseq
        %v1947 = vshrl.u32 %v1946, 7
        %v1948 = vsub.s32 %v1945, %v1947
        %v1949 = vrot.slane %v1921, %v1948
        %v1950 = vcombine.high %v1928, %v1928
        %v1951 = vcombine.high %v1935, %v1935
        %v1952 = vcombine.high %v1942, %v1942
        %v1953 = vcombine.high %v1949, %v1949
        %v1954 = vcombine.high %v1900, %v1900
        %v1956 = vunpack.c.l.s4 1966171168
        %v1957 = vunpack.c.0.s8 %v1956
        %v1958 = vlaneseq
        %v1959 = vshrl.u32 %v1958, 7
        %v1960 = vsub.s32 %v1957, %v1959
        %v1961 = vrot.slane %v1900, %v1960
        %v1963 = vunpack.c.l.s4 1966171168
        %v1964 = vunpack.c.0.s8 %v1963
        %v1965 = vlaneseq
        %v1966 = vshrl.u32 %v1965, 7
        %v1967 = vsub.s32 %v1964, %v1966
        %v1968 = vrot.slane %v1954, %v1967
        %v1969 = vcombine.high %v1961, %v1961
        %v1970 = vcombine.high %v1968, %v1968
        %v1972 = vunpack.c.l.s4 1966171168
        %v1973 = vunpack.c.0.s8 %v1972
        %v1974 = vlaneseq
        %v1975 = vshrl.u32 %v1974, 7
        %v1976 = vsub.s32 %v1973, %v1975
        %v1977 = vrot.slane %v1961, %v1976
        %v1979 = vunpack.c.l.s4 1966171168
        %v1980 = vunpack.c.0.s8 %v1979
        %v1981 = vlaneseq
        %v1982 = vshrl.u32 %v1981, 7
        %v1983 = vsub.s32 %v1980, %v1982
        %v1984 = vrot.slane %v1968, %v1983
        %v1986 = vunpack.c.l.s4 1966171168
        %v1987 = vunpack.c.0.s8 %v1986
        %v1988 = vlaneseq
        %v1989 = vshrl.u32 %v1988, 7
        %v1990 = vsub.s32 %v1987, %v1989
        %v1991 = vrot.slane %v1969, %v1990
        %v1993 = vunpack.c.l.s4 1966171168
        %v1994 = vunpack.c.0.s8 %v1993
        %v1995 = vlaneseq
        %v1996 = vshrl.u32 %v1995, 7
        %v1997 = vsub.s32 %v1994, %v1996
        %v1998 = vrot.slane %v1970, %v1997
        %v1999 = vcombine.high %v1977, %v1977
        %v2000 = vcombine.high %v1991, %v1991
        %v2001 = vcombine.low %v1928, %v1942
        %v2002 = vcombine.low %v1950, %v1952
        %v2003 = vcombine.low %v1935, %v1949
        %v2005 = vunpack.c.l.s4 1966171168
        %v2006 = vunpack.c.0.s8 %v2005
        %v2007 = vlaneseq
        %v2008 = vshrl.u32 %v2007, 7
        %v2009 = vsub.s32 %v2006, %v2008
        %v2010 = vrot.slane %v2001, %v2009
        %v2012 = vunpack.c.l.s4 1966171168
        %v2013 = vunpack.c.0.s8 %v2012
        %v2014 = vlaneseq
        %v2015 = vshrl.u32 %v2014, 7
        %v2016 = vsub.s32 %v2013, %v2015
        %v2017 = vrot.slane %v2002, %v2016
        %v2019 = vunpack.c.l.s4 1966171168
        %v2020 = vunpack.c.0.s8 %v2019
        %v2021 = vlaneseq
        %v2022 = vshrl.u32 %v2021, 7
        %v2023 = vsub.s32 %v2020, %v2022
        %v2024 = vrot.slane %v2003, %v2023
        %v2026 = vunpack.c.l.s4 1966171168
        %v2027 = vunpack.c.0.s8 %v2026
        %v2028 = vlaneseq
        %v2029 = vshrl.u32 %v2028, 7
        %v2030 = vsub.s32 %v2027, %v2029
        %v2031 = vrot.slane %v1951, %v2030
        %v2032 = vcombine.low %v2010, %v2017
        %v2033 = vcombine.low %v2024, %v2031
        %v2035 = vunpack.c.l.s4 1966171168
        %v2036 = vunpack.c.0.s8 %v2035
        %v2037 = vlaneseq
        %v2038 = vshrl.u32 %v2037, 7
        %v2039 = vsub.s32 %v2036, %v2038
        %v2040 = vrot.slane %v2032, %v2039
        %v2042 = vunpack.c.l.s4 1966171168
        %v2043 = vunpack.c.0.s8 %v2042
        %v2044 = vlaneseq
        %v2045 = vshrl.u32 %v2044, 7
        %v2046 = vsub.s32 %v2043, %v2045
        %v2047 = vrot.slane %v2033, %v2046
        %v2048 = vcombine.low %v2040, %v2047
        %v2049 = vcombine.low %v1953, %v1977
        %v2050 = vcombine.low %v1991, %v1999
        %v2051 = vcombine.low %v2000, %v1984
        %v2053 = vunpack.c.l.s4 1966171168
        %v2054 = vunpack.c.0.s8 %v2053
        %v2055 = vlaneseq
        %v2056 = vshrl.u32 %v2055, 7
        %v2057 = vsub.s32 %v2054, %v2056
        %v2058 = vrot.slane %v2049, %v2057
        %v2060 = vunpack.c.l.s4 1966171168
        %v2061 = vunpack.c.0.s8 %v2060
        %v2062 = vlaneseq
        %v2063 = vshrl.u32 %v2062, 7
        %v2064 = vsub.s32 %v2061, %v2063
        %v2065 = vrot.slane %v2050, %v2064
        %v2067 = vunpack.c.l.s4 1966171168
        %v2068 = vunpack.c.0.s8 %v2067
        %v2069 = vlaneseq
        %v2070 = vshrl.u32 %v2069, 7
        %v2071 = vsub.s32 %v2068, %v2070
        %v2072 = vrot.slane %v2051, %v2071
        %v2074 = vunpack.c.l.s4 1966171168
        %v2075 = vunpack.c.0.s8 %v2074
        %v2076 = vlaneseq
        %v2077 = vshrl.u32 %v2076, 7
        %v2078 = vsub.s32 %v2075, %v2077
        %v2079 = vrot.slane %v1998, %v2078
        %v2080 = vcombine.low %v2058, %v2065
        %v2081 = vcombine.low %v2072, %v2079
        %v2083 = vunpack.c.l.s4 1966171168
        %v2084 = vunpack.c.0.s8 %v2083
        %v2085 = vlaneseq
        %v2086 = vshrl.u32 %v2085, 7
        %v2087 = vsub.s32 %v2084, %v2086
        %v2088 = vrot.slane %v2080, %v2087
        %v2090 = vunpack.c.l.s4 1966171168
        %v2091 = vunpack.c.0.s8 %v2090
        %v2092 = vlaneseq
        %v2093 = vshrl.u32 %v2092, 7
        %v2094 = vsub.s32 %v2091, %v2093
        %v2095 = vrot.slane %v2081, %v2094
        %v2096 = vcombine.low %v2088, %v2095
        %v2099 = vsel %vm585, %v2048, 0.0
        %v2100 = vrot.slane %v2099, 4
        %v2101 = vadd.f32 %v2099, %v2100
        %v2102 = vrot.slane %v2101, 2
        %v2103 = vadd.f32 %v2101, %v2102
        %v2104 = vrot.slane %v2103, 1
        %v2105 = vadd.f32 %v2103, %v2104
        %v2106 = vsel %vm585, %v2096, 0.0
        %v2107 = vrot.slane %v2106, 4
        %v2108 = vadd.f32 %v2106, %v2107
        %v2109 = vrot.slane %v2108, 2
        %v2110 = vadd.f32 %v2108, %v2109
        %v2111 = vrot.slane %v2110, 1
        %v2112 = vadd.f32 %v2110, %v2111
        %v2113 = vmul.f32 %v2105, %v2105
        %v2114 = vmul.f32 %v2112, %v2112
        %v2115 = vadd.f32 %v1812, %v2113
        %v2116 = vadd.f32 %v1813, %v2114
        %vm2117 = vcmp.le.f32.partialorder %v296, -0.76604444
        %vm2118 = vcmp.le.f32.partialorder %v297, -0.76604444
        %vm2119 = vmxor %vm2117, 1
        %vm2120 = vmxor %vm2118, 1
        %vm2121 = vmand %vm1814, %vm2119
        %vm2122 = vmand %vm1815, %vm2120
        %v2123 = vsel %vm2121, %v272, 0.0
        %v2124 = vsel %vm2122, %v279, 0.0
        %v2126 = vsel %vm304, %v2123, 0
        %v2129 = vsel %vm304, %v2124, 0
        %2131 = vmatprep.subr.mxu0 0.0
        %2132 = vmatpush1.msra.mxu0 %v298
        %2133 = vmatprep.subr.mxu0 0.0
        %2134 = vmatpush1.msra.mxu0 %v312
        %2135 = vmatprep.subr.mxu0 0.0
        %2136 = vmatpush1.msra.mxu0 0.0
        %2137 = vmatprep.subr.mxu0 0.0
        %2138 = vmatpush1.msra.mxu0 0.0
        %2139 = vmatprep.subr.mxu0 0.0
        %2140 = vmatpush1.msra.mxu0 0.0
        %2141 = vmatprep.subr.mxu0 0.0
        %2142 = vmatpush1.msra.mxu0 0.0
        %2143 = vmatprep.subr.mxu0 0.0
        %2144 = vmatpush1.msra.mxu0 0.0
        %2145 = vmatprep.subr.mxu0 0.0
        %2146 = vmatpush1.msra.mxu0 0.0
        %2147 = vmatprep.subr.mxu0 0.0
        %2148 = vmatpush1.msra.mxu0 0.0
        %2149 = vmatprep.subr.mxu0 0.0
        %2150 = vmatpush1.msra.mxu0 0.0
        %2151 = vmatprep.subr.mxu0 0.0
        %2152 = vmatpush1.msra.mxu0 0.0
        %2153 = vmatprep.subr.mxu0 0.0
        %2154 = vmatpush1.msra.mxu0 0.0
        %2155 = vmatprep.subr.mxu0 0.0
        %2156 = vmatpush1.msra.mxu0 0.0
        %2157 = vmatprep.subr.mxu0 0.0
        %2158 = vmatpush1.msra.mxu0 0.0
        %2159 = vmatprep.subr.mxu0 0.0
        %2160 = vmatpush1.msra.mxu0 0.0
        %2161 = vmatprep.subr.mxu0 0.0
        %2162 = vmatpush1.msra.mxu0 0.0
        %2163 = vmatprep.subr.mxu0 0.0
        %2164 = vmatpush1.msra.mxu0 0.0
        %2165 = vmatprep.subr.mxu0 0.0
        %2166 = vmatpush1.msra.mxu0 0.0
        %2167 = vmatprep.subr.mxu0 0.0
        %2168 = vmatpush1.msra.mxu0 0.0
        %2169 = vmatprep.subr.mxu0 0.0
        %2170 = vmatpush1.msra.mxu0 0.0
        %2171 = vmatprep.subr.mxu0 0.0
        %2172 = vmatpush1.msra.mxu0 0.0
        %2173 = vmatprep.subr.mxu0 0.0
        %2174 = vmatpush1.msra.mxu0 0.0
        %2175 = vmatprep.subr.mxu0 0.0
        %2176 = vmatpush1.msra.mxu0 0.0
        %2177 = vmatprep.subr.mxu0 0.0
        %2178 = vmatpush1.msra.mxu0 0.0
        %2179 = vmatprep.subr.mxu0 0.0
        %2180 = vmatpush1.msra.mxu0 0.0
        %2181 = vmatprep.subr.mxu0 0.0
        %2182 = vmatpush1.msra.mxu0 0.0
        %2183 = vmatprep.subr.mxu0 0.0
        %2184 = vmatpush1.msra.mxu0 0.0
        %2185 = vmatprep.subr.mxu0 0.0
        %2186 = vmatpush1.msra.mxu0 0.0
        %2187 = vmatprep.subr.mxu0 0.0
        %2188 = vmatpush1.msra.mxu0 0.0
        %2189 = vmatprep.subr.mxu0 0.0
        %2190 = vmatpush1.msra.mxu0 0.0
        %2191 = vmatprep.subr.mxu0 0.0
        %2192 = vmatpush1.msra.mxu0 0.0
        %2193 = vmatprep.subr.mxu0 0.0
        %2194 = vmatpush1.msra.mxu0 0.0
        %2195 = vmatprep.mubr.f32.mxu0 0.0
        %2196 = vmatmul.mubr.f32.gmra.mrb[0].mxu0 %v2126
        %v2197 = vpop.f32.mrb[0].mxu0
        %v2198 = vadd.f32 0.0, %v2197
        %v2199 = vpop.f32.mrb[0].mxu0
        %2200 = vmatprep.mubr.f32.mxu0 0.0
        %2201 = vmatmul.mubr.f32.gmra.mrb[0].mxu0 %v2129
        %v2202 = vpop.f32.mrb[0].mxu0
        %v2203 = vadd.f32 0.0, %v2202
        %v2204 = vpop.f32.mrb[0].mxu0
        %2205 = vdwg.mxu0
        %v2208 = vcombine.high %v2198, %v2198
        %v2210 = vunpack.c.l.s4 1966171168
        %v2211 = vunpack.c.0.s8 %v2210
        %v2212 = vlaneseq
        %v2213 = vshrl.u32 %v2212, 7
        %v2214 = vsub.s32 %v2211, %v2213
        %v2215 = vrot.slane %v2198, %v2214
        %v2217 = vunpack.c.l.s4 1966171168
        %v2218 = vunpack.c.0.s8 %v2217
        %v2219 = vlaneseq
        %v2220 = vshrl.u32 %v2219, 7
        %v2221 = vsub.s32 %v2218, %v2220
        %v2222 = vrot.slane %v2208, %v2221
        %v2223 = vcombine.high %v2215, %v2215
        %v2224 = vcombine.high %v2222, %v2222
        %v2226 = vunpack.c.l.s4 1966171168
        %v2227 = vunpack.c.0.s8 %v2226
        %v2228 = vlaneseq
        %v2229 = vshrl.u32 %v2228, 7
        %v2230 = vsub.s32 %v2227, %v2229
        %v2231 = vrot.slane %v2215, %v2230
        %v2233 = vunpack.c.l.s4 1966171168
        %v2234 = vunpack.c.0.s8 %v2233
        %v2235 = vlaneseq
        %v2236 = vshrl.u32 %v2235, 7
        %v2237 = vsub.s32 %v2234, %v2236
        %v2238 = vrot.slane %v2222, %v2237
        %v2240 = vunpack.c.l.s4 1966171168
        %v2241 = vunpack.c.0.s8 %v2240
        %v2242 = vlaneseq
        %v2243 = vshrl.u32 %v2242, 7
        %v2244 = vsub.s32 %v2241, %v2243
        %v2245 = vrot.slane %v2223, %v2244
        %v2247 = vunpack.c.l.s4 1966171168
        %v2248 = vunpack.c.0.s8 %v2247
        %v2249 = vlaneseq
        %v2250 = vshrl.u32 %v2249, 7
        %v2251 = vsub.s32 %v2248, %v2250
        %v2252 = vrot.slane %v2224, %v2251
        %v2253 = vcombine.high %v2231, %v2231
        %v2254 = vcombine.high %v2238, %v2238
        %v2255 = vcombine.high %v2245, %v2245
        %v2256 = vcombine.high %v2252, %v2252
        %v2257 = vcombine.high %v2203, %v2203
        %v2259 = vunpack.c.l.s4 1966171168
        %v2260 = vunpack.c.0.s8 %v2259
        %v2261 = vlaneseq
        %v2262 = vshrl.u32 %v2261, 7
        %v2263 = vsub.s32 %v2260, %v2262
        %v2264 = vrot.slane %v2203, %v2263
        %v2266 = vunpack.c.l.s4 1966171168
        %v2267 = vunpack.c.0.s8 %v2266
        %v2268 = vlaneseq
        %v2269 = vshrl.u32 %v2268, 7
        %v2270 = vsub.s32 %v2267, %v2269
        %v2271 = vrot.slane %v2257, %v2270
        %v2272 = vcombine.high %v2264, %v2264
        %v2273 = vcombine.high %v2271, %v2271
        %v2275 = vunpack.c.l.s4 1966171168
        %v2276 = vunpack.c.0.s8 %v2275
        %v2277 = vlaneseq
        %v2278 = vshrl.u32 %v2277, 7
        %v2279 = vsub.s32 %v2276, %v2278
        %v2280 = vrot.slane %v2264, %v2279
        %v2282 = vunpack.c.l.s4 1966171168
        %v2283 = vunpack.c.0.s8 %v2282
        %v2284 = vlaneseq
        %v2285 = vshrl.u32 %v2284, 7
        %v2286 = vsub.s32 %v2283, %v2285
        %v2287 = vrot.slane %v2271, %v2286
        %v2289 = vunpack.c.l.s4 1966171168
        %v2290 = vunpack.c.0.s8 %v2289
        %v2291 = vlaneseq
        %v2292 = vshrl.u32 %v2291, 7
        %v2293 = vsub.s32 %v2290, %v2292
        %v2294 = vrot.slane %v2272, %v2293
        %v2296 = vunpack.c.l.s4 1966171168
        %v2297 = vunpack.c.0.s8 %v2296
        %v2298 = vlaneseq
        %v2299 = vshrl.u32 %v2298, 7
        %v2300 = vsub.s32 %v2297, %v2299
        %v2301 = vrot.slane %v2273, %v2300
        %v2302 = vcombine.high %v2280, %v2280
        %v2303 = vcombine.high %v2294, %v2294
        %v2304 = vcombine.low %v2231, %v2245
        %v2305 = vcombine.low %v2253, %v2255
        %v2306 = vcombine.low %v2238, %v2252
        %v2308 = vunpack.c.l.s4 1966171168
        %v2309 = vunpack.c.0.s8 %v2308
        %v2310 = vlaneseq
        %v2311 = vshrl.u32 %v2310, 7
        %v2312 = vsub.s32 %v2309, %v2311
        %v2313 = vrot.slane %v2304, %v2312
        %v2315 = vunpack.c.l.s4 1966171168
        %v2316 = vunpack.c.0.s8 %v2315
        %v2317 = vlaneseq
        %v2318 = vshrl.u32 %v2317, 7
        %v2319 = vsub.s32 %v2316, %v2318
        %v2320 = vrot.slane %v2305, %v2319
        %v2322 = vunpack.c.l.s4 1966171168
        %v2323 = vunpack.c.0.s8 %v2322
        %v2324 = vlaneseq
        %v2325 = vshrl.u32 %v2324, 7
        %v2326 = vsub.s32 %v2323, %v2325
        %v2327 = vrot.slane %v2306, %v2326
        %v2329 = vunpack.c.l.s4 1966171168
        %v2330 = vunpack.c.0.s8 %v2329
        %v2331 = vlaneseq
        %v2332 = vshrl.u32 %v2331, 7
        %v2333 = vsub.s32 %v2330, %v2332
        %v2334 = vrot.slane %v2254, %v2333
        %v2335 = vcombine.low %v2313, %v2320
        %v2336 = vcombine.low %v2327, %v2334
        %v2338 = vunpack.c.l.s4 1966171168
        %v2339 = vunpack.c.0.s8 %v2338
        %v2340 = vlaneseq
        %v2341 = vshrl.u32 %v2340, 7
        %v2342 = vsub.s32 %v2339, %v2341
        %v2343 = vrot.slane %v2335, %v2342
        %v2345 = vunpack.c.l.s4 1966171168
        %v2346 = vunpack.c.0.s8 %v2345
        %v2347 = vlaneseq
        %v2348 = vshrl.u32 %v2347, 7
        %v2349 = vsub.s32 %v2346, %v2348
        %v2350 = vrot.slane %v2336, %v2349
        %v2351 = vcombine.low %v2343, %v2350
        %v2352 = vcombine.low %v2256, %v2280
        %v2353 = vcombine.low %v2294, %v2302
        %v2354 = vcombine.low %v2303, %v2287
        %v2356 = vunpack.c.l.s4 1966171168
        %v2357 = vunpack.c.0.s8 %v2356
        %v2358 = vlaneseq
        %v2359 = vshrl.u32 %v2358, 7
        %v2360 = vsub.s32 %v2357, %v2359
        %v2361 = vrot.slane %v2352, %v2360
        %v2363 = vunpack.c.l.s4 1966171168
        %v2364 = vunpack.c.0.s8 %v2363
        %v2365 = vlaneseq
        %v2366 = vshrl.u32 %v2365, 7
        %v2367 = vsub.s32 %v2364, %v2366
        %v2368 = vrot.slane %v2353, %v2367
        %v2370 = vunpack.c.l.s4 1966171168
        %v2371 = vunpack.c.0.s8 %v2370
        %v2372 = vlaneseq
        %v2373 = vshrl.u32 %v2372, 7
        %v2374 = vsub.s32 %v2371, %v2373
        %v2375 = vrot.slane %v2354, %v2374
        %v2377 = vunpack.c.l.s4 1966171168
        %v2378 = vunpack.c.0.s8 %v2377
        %v2379 = vlaneseq
        %v2380 = vshrl.u32 %v2379, 7
        %v2381 = vsub.s32 %v2378, %v2380
        %v2382 = vrot.slane %v2301, %v2381
        %v2383 = vcombine.low %v2361, %v2368
        %v2384 = vcombine.low %v2375, %v2382
        %v2386 = vunpack.c.l.s4 1966171168
        %v2387 = vunpack.c.0.s8 %v2386
        %v2388 = vlaneseq
        %v2389 = vshrl.u32 %v2388, 7
        %v2390 = vsub.s32 %v2387, %v2389
        %v2391 = vrot.slane %v2383, %v2390
        %v2393 = vunpack.c.l.s4 1966171168
        %v2394 = vunpack.c.0.s8 %v2393
        %v2395 = vlaneseq
        %v2396 = vshrl.u32 %v2395, 7
        %v2397 = vsub.s32 %v2394, %v2396
        %v2398 = vrot.slane %v2384, %v2397
        %v2399 = vcombine.low %v2391, %v2398
        %v2402 = vsel %vm585, %v2351, 0.0
        %v2403 = vrot.slane %v2402, 4
        %v2404 = vadd.f32 %v2402, %v2403
        %v2405 = vrot.slane %v2404, 2
        %v2406 = vadd.f32 %v2404, %v2405
        %v2407 = vrot.slane %v2406, 1
        %v2408 = vadd.f32 %v2406, %v2407
        %v2409 = vsel %vm585, %v2399, 0.0
        %v2410 = vrot.slane %v2409, 4
        %v2411 = vadd.f32 %v2409, %v2410
        %v2412 = vrot.slane %v2411, 2
        %v2413 = vadd.f32 %v2411, %v2412
        %v2414 = vrot.slane %v2413, 1
        %v2415 = vadd.f32 %v2413, %v2414
        %v2416 = vmul.f32 %v2408, %v2408
        %v2417 = vmul.f32 %v2415, %v2415
        %v2418 = vadd.f32 %v2115, %v2416
        %v2419 = vadd.f32 %v2116, %v2417
        %vm2420 = vcmp.le.f32.partialorder %v296, -0.9396926
        %vm2421 = vcmp.le.f32.partialorder %v297, -0.9396926
        %vm2422 = vmxor %vm2420, 1
        %vm2423 = vmxor %vm2421, 1
        %vm2424 = vmand %vm2117, %vm2422
        %vm2425 = vmand %vm2118, %vm2423
        %v2426 = vsel %vm2424, %v272, 0.0
        %v2427 = vsel %vm2425, %v279, 0.0
        %v2429 = vsel %vm304, %v2426, 0
        %v2432 = vsel %vm304, %v2427, 0
        %2434 = vmatprep.subr.mxu0 0.0
        %2435 = vmatpush1.msra.mxu0 %v298
        %2436 = vmatprep.subr.mxu0 0.0
        %2437 = vmatpush1.msra.mxu0 %v312
        %2438 = vmatprep.subr.mxu0 0.0
        %2439 = vmatpush1.msra.mxu0 0.0
        %2440 = vmatprep.subr.mxu0 0.0
        %2441 = vmatpush1.msra.mxu0 0.0
        %2442 = vmatprep.subr.mxu0 0.0
        %2443 = vmatpush1.msra.mxu0 0.0
        %2444 = vmatprep.subr.mxu0 0.0
        %2445 = vmatpush1.msra.mxu0 0.0
        %2446 = vmatprep.subr.mxu0 0.0
        %2447 = vmatpush1.msra.mxu0 0.0
        %2448 = vmatprep.subr.mxu0 0.0
        %2449 = vmatpush1.msra.mxu0 0.0
        %2450 = vmatprep.subr.mxu0 0.0
        %2451 = vmatpush1.msra.mxu0 0.0
        %2452 = vmatprep.subr.mxu0 0.0
        %2453 = vmatpush1.msra.mxu0 0.0
        %2454 = vmatprep.subr.mxu0 0.0
        %2455 = vmatpush1.msra.mxu0 0.0
        %2456 = vmatprep.subr.mxu0 0.0
        %2457 = vmatpush1.msra.mxu0 0.0
        %2458 = vmatprep.subr.mxu0 0.0
        %2459 = vmatpush1.msra.mxu0 0.0
        %2460 = vmatprep.subr.mxu0 0.0
        %2461 = vmatpush1.msra.mxu0 0.0
        %2462 = vmatprep.subr.mxu0 0.0
        %2463 = vmatpush1.msra.mxu0 0.0
        %2464 = vmatprep.subr.mxu0 0.0
        %2465 = vmatpush1.msra.mxu0 0.0
        %2466 = vmatprep.subr.mxu0 0.0
        %2467 = vmatpush1.msra.mxu0 0.0
        %2468 = vmatprep.subr.mxu0 0.0
        %2469 = vmatpush1.msra.mxu0 0.0
        %2470 = vmatprep.subr.mxu0 0.0
        %2471 = vmatpush1.msra.mxu0 0.0
        %2472 = vmatprep.subr.mxu0 0.0
        %2473 = vmatpush1.msra.mxu0 0.0
        %2474 = vmatprep.subr.mxu0 0.0
        %2475 = vmatpush1.msra.mxu0 0.0
        %2476 = vmatprep.subr.mxu0 0.0
        %2477 = vmatpush1.msra.mxu0 0.0
        %2478 = vmatprep.subr.mxu0 0.0
        %2479 = vmatpush1.msra.mxu0 0.0
        %2480 = vmatprep.subr.mxu0 0.0
        %2481 = vmatpush1.msra.mxu0 0.0
        %2482 = vmatprep.subr.mxu0 0.0
        %2483 = vmatpush1.msra.mxu0 0.0
        %2484 = vmatprep.subr.mxu0 0.0
        %2485 = vmatpush1.msra.mxu0 0.0
        %2486 = vmatprep.subr.mxu0 0.0
        %2487 = vmatpush1.msra.mxu0 0.0
        %2488 = vmatprep.subr.mxu0 0.0
        %2489 = vmatpush1.msra.mxu0 0.0
        %2490 = vmatprep.subr.mxu0 0.0
        %2491 = vmatpush1.msra.mxu0 0.0
        %2492 = vmatprep.subr.mxu0 0.0
        %2493 = vmatpush1.msra.mxu0 0.0
        %2494 = vmatprep.subr.mxu0 0.0
        %2495 = vmatpush1.msra.mxu0 0.0
        %2496 = vmatprep.subr.mxu0 0.0
        %2497 = vmatpush1.msra.mxu0 0.0
        %2498 = vmatprep.mubr.f32.mxu0 0.0
        %2499 = vmatmul.mubr.f32.gmra.mrb[0].mxu0 %v2429
        %v2500 = vpop.f32.mrb[0].mxu0
        %v2501 = vadd.f32 0.0, %v2500
        %v2502 = vpop.f32.mrb[0].mxu0
        %2503 = vmatprep.mubr.f32.mxu0 0.0
        %2504 = vmatmul.mubr.f32.gmra.mrb[0].mxu0 %v2432
        %v2505 = vpop.f32.mrb[0].mxu0
        %v2506 = vadd.f32 0.0, %v2505
        %v2507 = vpop.f32.mrb[0].mxu0
        %2508 = vdwg.mxu0
        %v2511 = vcombine.high %v2501, %v2501
        %v2513 = vunpack.c.l.s4 1966171168
        %v2514 = vunpack.c.0.s8 %v2513
        %v2515 = vlaneseq
        %v2516 = vshrl.u32 %v2515, 7
        %v2517 = vsub.s32 %v2514, %v2516
        %v2518 = vrot.slane %v2501, %v2517
        %v2520 = vunpack.c.l.s4 1966171168
        %v2521 = vunpack.c.0.s8 %v2520
        %v2522 = vlaneseq
        %v2523 = vshrl.u32 %v2522, 7
        %v2524 = vsub.s32 %v2521, %v2523
        %v2525 = vrot.slane %v2511, %v2524
        %v2526 = vcombine.high %v2518, %v2518
        %v2527 = vcombine.high %v2525, %v2525
        %v2529 = vunpack.c.l.s4 1966171168
        %v2530 = vunpack.c.0.s8 %v2529
        %v2531 = vlaneseq
        %v2532 = vshrl.u32 %v2531, 7
        %v2533 = vsub.s32 %v2530, %v2532
        %v2534 = vrot.slane %v2518, %v2533
        %v2536 = vunpack.c.l.s4 1966171168
        %v2537 = vunpack.c.0.s8 %v2536
        %v2538 = vlaneseq
        %v2539 = vshrl.u32 %v2538, 7
        %v2540 = vsub.s32 %v2537, %v2539
        %v2541 = vrot.slane %v2525, %v2540
        %v2543 = vunpack.c.l.s4 1966171168
        %v2544 = vunpack.c.0.s8 %v2543
        %v2545 = vlaneseq
        %v2546 = vshrl.u32 %v2545, 7
        %v2547 = vsub.s32 %v2544, %v2546
        %v2548 = vrot.slane %v2526, %v2547
        %v2550 = vunpack.c.l.s4 1966171168
        %v2551 = vunpack.c.0.s8 %v2550
        %v2552 = vlaneseq
        %v2553 = vshrl.u32 %v2552, 7
        %v2554 = vsub.s32 %v2551, %v2553
        %v2555 = vrot.slane %v2527, %v2554
        %v2556 = vcombine.high %v2534, %v2534
        %v2557 = vcombine.high %v2541, %v2541
        %v2558 = vcombine.high %v2548, %v2548
        %v2559 = vcombine.high %v2555, %v2555
        %v2560 = vcombine.high %v2506, %v2506
        %v2562 = vunpack.c.l.s4 1966171168
        %v2563 = vunpack.c.0.s8 %v2562
        %v2564 = vlaneseq
        %v2565 = vshrl.u32 %v2564, 7
        %v2566 = vsub.s32 %v2563, %v2565
        %v2567 = vrot.slane %v2506, %v2566
        %v2569 = vunpack.c.l.s4 1966171168
        %v2570 = vunpack.c.0.s8 %v2569
        %v2571 = vlaneseq
        %v2572 = vshrl.u32 %v2571, 7
        %v2573 = vsub.s32 %v2570, %v2572
        %v2574 = vrot.slane %v2560, %v2573
        %v2575 = vcombine.high %v2567, %v2567
        %v2576 = vcombine.high %v2574, %v2574
        %v2578 = vunpack.c.l.s4 1966171168
        %v2579 = vunpack.c.0.s8 %v2578
        %v2580 = vlaneseq
        %v2581 = vshrl.u32 %v2580, 7
        %v2582 = vsub.s32 %v2579, %v2581
        %v2583 = vrot.slane %v2567, %v2582
        %v2585 = vunpack.c.l.s4 1966171168
        %v2586 = vunpack.c.0.s8 %v2585
        %v2587 = vlaneseq
        %v2588 = vshrl.u32 %v2587, 7
        %v2589 = vsub.s32 %v2586, %v2588
        %v2590 = vrot.slane %v2574, %v2589
        %v2592 = vunpack.c.l.s4 1966171168
        %v2593 = vunpack.c.0.s8 %v2592
        %v2594 = vlaneseq
        %v2595 = vshrl.u32 %v2594, 7
        %v2596 = vsub.s32 %v2593, %v2595
        %v2597 = vrot.slane %v2575, %v2596
        %v2599 = vunpack.c.l.s4 1966171168
        %v2600 = vunpack.c.0.s8 %v2599
        %v2601 = vlaneseq
        %v2602 = vshrl.u32 %v2601, 7
        %v2603 = vsub.s32 %v2600, %v2602
        %v2604 = vrot.slane %v2576, %v2603
        %v2605 = vcombine.high %v2583, %v2583
        %v2606 = vcombine.high %v2597, %v2597
        %v2607 = vcombine.low %v2534, %v2548
        %v2608 = vcombine.low %v2556, %v2558
        %v2609 = vcombine.low %v2541, %v2555
        %v2611 = vunpack.c.l.s4 1966171168
        %v2612 = vunpack.c.0.s8 %v2611
        %v2613 = vlaneseq
        %v2614 = vshrl.u32 %v2613, 7
        %v2615 = vsub.s32 %v2612, %v2614
        %v2616 = vrot.slane %v2607, %v2615
        %v2618 = vunpack.c.l.s4 1966171168
        %v2619 = vunpack.c.0.s8 %v2618
        %v2620 = vlaneseq
        %v2621 = vshrl.u32 %v2620, 7
        %v2622 = vsub.s32 %v2619, %v2621
        %v2623 = vrot.slane %v2608, %v2622
        %v2625 = vunpack.c.l.s4 1966171168
        %v2626 = vunpack.c.0.s8 %v2625
        %v2627 = vlaneseq
        %v2628 = vshrl.u32 %v2627, 7
        %v2629 = vsub.s32 %v2626, %v2628
        %v2630 = vrot.slane %v2609, %v2629
        %v2632 = vunpack.c.l.s4 1966171168
        %v2633 = vunpack.c.0.s8 %v2632
        %v2634 = vlaneseq
        %v2635 = vshrl.u32 %v2634, 7
        %v2636 = vsub.s32 %v2633, %v2635
        %v2637 = vrot.slane %v2557, %v2636
        %v2638 = vcombine.low %v2616, %v2623
        %v2639 = vcombine.low %v2630, %v2637
        %v2641 = vunpack.c.l.s4 1966171168
        %v2642 = vunpack.c.0.s8 %v2641
        %v2643 = vlaneseq
        %v2644 = vshrl.u32 %v2643, 7
        %v2645 = vsub.s32 %v2642, %v2644
        %v2646 = vrot.slane %v2638, %v2645
        %v2648 = vunpack.c.l.s4 1966171168
        %v2649 = vunpack.c.0.s8 %v2648
        %v2650 = vlaneseq
        %v2651 = vshrl.u32 %v2650, 7
        %v2652 = vsub.s32 %v2649, %v2651
        %v2653 = vrot.slane %v2639, %v2652
        %v2654 = vcombine.low %v2646, %v2653
        %v2655 = vcombine.low %v2559, %v2583
        %v2656 = vcombine.low %v2597, %v2605
        %v2657 = vcombine.low %v2606, %v2590
        %v2659 = vunpack.c.l.s4 1966171168
        %v2660 = vunpack.c.0.s8 %v2659
        %v2661 = vlaneseq
        %v2662 = vshrl.u32 %v2661, 7
        %v2663 = vsub.s32 %v2660, %v2662
        %v2664 = vrot.slane %v2655, %v2663
        %v2666 = vunpack.c.l.s4 1966171168
        %v2667 = vunpack.c.0.s8 %v2666
        %v2668 = vlaneseq
        %v2669 = vshrl.u32 %v2668, 7
        %v2670 = vsub.s32 %v2667, %v2669
        %v2671 = vrot.slane %v2656, %v2670
        %v2673 = vunpack.c.l.s4 1966171168
        %v2674 = vunpack.c.0.s8 %v2673
        %v2675 = vlaneseq
        %v2676 = vshrl.u32 %v2675, 7
        %v2677 = vsub.s32 %v2674, %v2676
        %v2678 = vrot.slane %v2657, %v2677
        %v2680 = vunpack.c.l.s4 1966171168
        %v2681 = vunpack.c.0.s8 %v2680
        %v2682 = vlaneseq
        %v2683 = vshrl.u32 %v2682, 7
        %v2684 = vsub.s32 %v2681, %v2683
        %v2685 = vrot.slane %v2604, %v2684
        %v2686 = vcombine.low %v2664, %v2671
        %v2687 = vcombine.low %v2678, %v2685
        %v2689 = vunpack.c.l.s4 1966171168
        %v2690 = vunpack.c.0.s8 %v2689
        %v2691 = vlaneseq
        %v2692 = vshrl.u32 %v2691, 7
        %v2693 = vsub.s32 %v2690, %v2692
        %v2694 = vrot.slane %v2686, %v2693
        %v2696 = vunpack.c.l.s4 1966171168
        %v2697 = vunpack.c.0.s8 %v2696
        %v2698 = vlaneseq
        %v2699 = vshrl.u32 %v2698, 7
        %v2700 = vsub.s32 %v2697, %v2699
        %v2701 = vrot.slane %v2687, %v2700
        %v2702 = vcombine.low %v2694, %v2701
        %v2705 = vsel %vm585, %v2654, 0.0
        %v2706 = vrot.slane %v2705, 4
        %v2707 = vadd.f32 %v2705, %v2706
        %v2708 = vrot.slane %v2707, 2
        %v2709 = vadd.f32 %v2707, %v2708
        %v2710 = vrot.slane %v2709, 1
        %v2711 = vadd.f32 %v2709, %v2710
        %v2712 = vsel %vm585, %v2702, 0.0
        %v2713 = vrot.slane %v2712, 4
        %v2714 = vadd.f32 %v2712, %v2713
        %v2715 = vrot.slane %v2714, 2
        %v2716 = vadd.f32 %v2714, %v2715
        %v2717 = vrot.slane %v2716, 1
        %v2718 = vadd.f32 %v2716, %v2717
        %v2719 = vmul.f32 %v2711, %v2711
        %v2720 = vmul.f32 %v2718, %v2718
        %v2721 = vadd.f32 %v2418, %v2719
        %v2722 = vadd.f32 %v2419, %v2720
        %v2723 = vsel %vm2420, %v272, 0.0
        %v2724 = vsel %vm2421, %v279, 0.0
        %v2726 = vsel %vm304, %v2723, 0
        %v2729 = vsel %vm304, %v2724, 0
        %2731 = vmatprep.subr.mxu0 0.0
        %2732 = vmatpush1.msra.mxu0 %v298
        %2733 = vmatprep.subr.mxu0 0.0
        %2734 = vmatpush1.msra.mxu0 %v312
        %2735 = vmatprep.subr.mxu0 0.0
        %2736 = vmatpush1.msra.mxu0 0.0
        %2737 = vmatprep.subr.mxu0 0.0
        %2738 = vmatpush1.msra.mxu0 0.0
        %2739 = vmatprep.subr.mxu0 0.0
        %2740 = vmatpush1.msra.mxu0 0.0
        %2741 = vmatprep.subr.mxu0 0.0
        %2742 = vmatpush1.msra.mxu0 0.0
        %2743 = vmatprep.subr.mxu0 0.0
        %2744 = vmatpush1.msra.mxu0 0.0
        %2745 = vmatprep.subr.mxu0 0.0
        %2746 = vmatpush1.msra.mxu0 0.0
        %2747 = vmatprep.subr.mxu0 0.0
        %2748 = vmatpush1.msra.mxu0 0.0
        %2749 = vmatprep.subr.mxu0 0.0
        %2750 = vmatpush1.msra.mxu0 0.0
        %2751 = vmatprep.subr.mxu0 0.0
        %2752 = vmatpush1.msra.mxu0 0.0
        %2753 = vmatprep.subr.mxu0 0.0
        %2754 = vmatpush1.msra.mxu0 0.0
        %2755 = vmatprep.subr.mxu0 0.0
        %2756 = vmatpush1.msra.mxu0 0.0
        %2757 = vmatprep.subr.mxu0 0.0
        %2758 = vmatpush1.msra.mxu0 0.0
        %2759 = vmatprep.subr.mxu0 0.0
        %2760 = vmatpush1.msra.mxu0 0.0
        %2761 = vmatprep.subr.mxu0 0.0
        %2762 = vmatpush1.msra.mxu0 0.0
        %2763 = vmatprep.subr.mxu0 0.0
        %2764 = vmatpush1.msra.mxu0 0.0
        %2765 = vmatprep.subr.mxu0 0.0
        %2766 = vmatpush1.msra.mxu0 0.0
        %2767 = vmatprep.subr.mxu0 0.0
        %2768 = vmatpush1.msra.mxu0 0.0
        %2769 = vmatprep.subr.mxu0 0.0
        %2770 = vmatpush1.msra.mxu0 0.0
        %2771 = vmatprep.subr.mxu0 0.0
        %2772 = vmatpush1.msra.mxu0 0.0
        %2773 = vmatprep.subr.mxu0 0.0
        %2774 = vmatpush1.msra.mxu0 0.0
        %2775 = vmatprep.subr.mxu0 0.0
        %2776 = vmatpush1.msra.mxu0 0.0
        %2777 = vmatprep.subr.mxu0 0.0
        %2778 = vmatpush1.msra.mxu0 0.0
        %2779 = vmatprep.subr.mxu0 0.0
        %2780 = vmatpush1.msra.mxu0 0.0
        %2781 = vmatprep.subr.mxu0 0.0
        %2782 = vmatpush1.msra.mxu0 0.0
        %2783 = vmatprep.subr.mxu0 0.0
        %2784 = vmatpush1.msra.mxu0 0.0
        %2785 = vmatprep.subr.mxu0 0.0
        %2786 = vmatpush1.msra.mxu0 0.0
        %2787 = vmatprep.subr.mxu0 0.0
        %2788 = vmatpush1.msra.mxu0 0.0
        %2789 = vmatprep.subr.mxu0 0.0
        %2790 = vmatpush1.msra.mxu0 0.0
        %2791 = vmatprep.subr.mxu0 0.0
        %2792 = vmatpush1.msra.mxu0 0.0
        %2793 = vmatprep.subr.mxu0 0.0
        %2794 = vmatpush1.msra.mxu0 0.0
        %2795 = vmatprep.mubr.f32.mxu0 0.0
        %2796 = vmatmul.mubr.f32.gmra.mrb[0].mxu0 %v2726
        %v2797 = vpop.f32.mrb[0].mxu0
        %v2798 = vadd.f32 0.0, %v2797
        %v2799 = vpop.f32.mrb[0].mxu0
        %2800 = vmatprep.mubr.f32.mxu0 0.0
        %2801 = vmatmul.mubr.f32.gmra.mrb[0].mxu0 %v2729
        %v2802 = vpop.f32.mrb[0].mxu0
        %v2803 = vadd.f32 0.0, %v2802
        %v2804 = vpop.f32.mrb[0].mxu0
        %2805 = vdwg.mxu0
        %v2808 = vcombine.high %v2798, %v2798
        %v2810 = vunpack.c.l.s4 1966171168
        %v2811 = vunpack.c.0.s8 %v2810
        %v2812 = vlaneseq
        %v2813 = vshrl.u32 %v2812, 7
        %v2814 = vsub.s32 %v2811, %v2813
        %v2815 = vrot.slane %v2798, %v2814
        %v2817 = vunpack.c.l.s4 1966171168
        %v2818 = vunpack.c.0.s8 %v2817
        %v2819 = vlaneseq
        %v2820 = vshrl.u32 %v2819, 7
        %v2821 = vsub.s32 %v2818, %v2820
        %v2822 = vrot.slane %v2808, %v2821
        %v2823 = vcombine.high %v2815, %v2815
        %v2824 = vcombine.high %v2822, %v2822
        %v2826 = vunpack.c.l.s4 1966171168
        %v2827 = vunpack.c.0.s8 %v2826
        %v2828 = vlaneseq
        %v2829 = vshrl.u32 %v2828, 7
        %v2830 = vsub.s32 %v2827, %v2829
        %v2831 = vrot.slane %v2815, %v2830
        %v2833 = vunpack.c.l.s4 1966171168
        %v2834 = vunpack.c.0.s8 %v2833
        %v2835 = vlaneseq
        %v2836 = vshrl.u32 %v2835, 7
        %v2837 = vsub.s32 %v2834, %v2836
        %v2838 = vrot.slane %v2822, %v2837
        %v2840 = vunpack.c.l.s4 1966171168
        %v2841 = vunpack.c.0.s8 %v2840
        %v2842 = vlaneseq
        %v2843 = vshrl.u32 %v2842, 7
        %v2844 = vsub.s32 %v2841, %v2843
        %v2845 = vrot.slane %v2823, %v2844
        %v2847 = vunpack.c.l.s4 1966171168
        %v2848 = vunpack.c.0.s8 %v2847
        %v2849 = vlaneseq
        %v2850 = vshrl.u32 %v2849, 7
        %v2851 = vsub.s32 %v2848, %v2850
        %v2852 = vrot.slane %v2824, %v2851
        %v2853 = vcombine.high %v2831, %v2831
        %v2854 = vcombine.high %v2838, %v2838
        %v2855 = vcombine.high %v2845, %v2845
        %v2856 = vcombine.high %v2852, %v2852
        %v2857 = vcombine.high %v2803, %v2803
        %v2859 = vunpack.c.l.s4 1966171168
        %v2860 = vunpack.c.0.s8 %v2859
        %v2861 = vlaneseq
        %v2862 = vshrl.u32 %v2861, 7
        %v2863 = vsub.s32 %v2860, %v2862
        %v2864 = vrot.slane %v2803, %v2863
        %v2866 = vunpack.c.l.s4 1966171168
        %v2867 = vunpack.c.0.s8 %v2866
        %v2868 = vlaneseq
        %v2869 = vshrl.u32 %v2868, 7
        %v2870 = vsub.s32 %v2867, %v2869
        %v2871 = vrot.slane %v2857, %v2870
        %v2872 = vcombine.high %v2864, %v2864
        %v2873 = vcombine.high %v2871, %v2871
        %v2875 = vunpack.c.l.s4 1966171168
        %v2876 = vunpack.c.0.s8 %v2875
        %v2877 = vlaneseq
        %v2878 = vshrl.u32 %v2877, 7
        %v2879 = vsub.s32 %v2876, %v2878
        %v2880 = vrot.slane %v2864, %v2879
        %v2882 = vunpack.c.l.s4 1966171168
        %v2883 = vunpack.c.0.s8 %v2882
        %v2884 = vlaneseq
        %v2885 = vshrl.u32 %v2884, 7
        %v2886 = vsub.s32 %v2883, %v2885
        %v2887 = vrot.slane %v2871, %v2886
        %v2889 = vunpack.c.l.s4 1966171168
        %v2890 = vunpack.c.0.s8 %v2889
        %v2891 = vlaneseq
        %v2892 = vshrl.u32 %v2891, 7
        %v2893 = vsub.s32 %v2890, %v2892
        %v2894 = vrot.slane %v2872, %v2893
        %v2896 = vunpack.c.l.s4 1966171168
        %v2897 = vunpack.c.0.s8 %v2896
        %v2898 = vlaneseq
        %v2899 = vshrl.u32 %v2898, 7
        %v2900 = vsub.s32 %v2897, %v2899
        %v2901 = vrot.slane %v2873, %v2900
        %v2902 = vcombine.high %v2880, %v2880
        %v2903 = vcombine.high %v2894, %v2894
        %v2904 = vcombine.low %v2831, %v2845
        %v2905 = vcombine.low %v2853, %v2855
        %v2906 = vcombine.low %v2838, %v2852
        %v2908 = vunpack.c.l.s4 1966171168
        %v2909 = vunpack.c.0.s8 %v2908
        %v2910 = vlaneseq
        %v2911 = vshrl.u32 %v2910, 7
        %v2912 = vsub.s32 %v2909, %v2911
        %v2913 = vrot.slane %v2904, %v2912
        %v2915 = vunpack.c.l.s4 1966171168
        %v2916 = vunpack.c.0.s8 %v2915
        %v2917 = vlaneseq
        %v2918 = vshrl.u32 %v2917, 7
        %v2919 = vsub.s32 %v2916, %v2918
        %v2920 = vrot.slane %v2905, %v2919
        %v2922 = vunpack.c.l.s4 1966171168
        %v2923 = vunpack.c.0.s8 %v2922
        %v2924 = vlaneseq
        %v2925 = vshrl.u32 %v2924, 7
        %v2926 = vsub.s32 %v2923, %v2925
        %v2927 = vrot.slane %v2906, %v2926
        %v2929 = vunpack.c.l.s4 1966171168
        %v2930 = vunpack.c.0.s8 %v2929
        %v2931 = vlaneseq
        %v2932 = vshrl.u32 %v2931, 7
        %v2933 = vsub.s32 %v2930, %v2932
        %v2934 = vrot.slane %v2854, %v2933
        %v2935 = vcombine.low %v2913, %v2920
        %v2936 = vcombine.low %v2927, %v2934
        %v2938 = vunpack.c.l.s4 1966171168
        %v2939 = vunpack.c.0.s8 %v2938
        %v2940 = vlaneseq
        %v2941 = vshrl.u32 %v2940, 7
        %v2942 = vsub.s32 %v2939, %v2941
        %v2943 = vrot.slane %v2935, %v2942
        %v2945 = vunpack.c.l.s4 1966171168
        %v2946 = vunpack.c.0.s8 %v2945
        %v2947 = vlaneseq
        %v2948 = vshrl.u32 %v2947, 7
        %v2949 = vsub.s32 %v2946, %v2948
        %v2950 = vrot.slane %v2936, %v2949
        %v2951 = vcombine.low %v2943, %v2950
        %v2952 = vcombine.low %v2856, %v2880
        %v2953 = vcombine.low %v2894, %v2902
        %v2954 = vcombine.low %v2903, %v2887
        %v2956 = vunpack.c.l.s4 1966171168
        %v2957 = vunpack.c.0.s8 %v2956
        %v2958 = vlaneseq
        %v2959 = vshrl.u32 %v2958, 7
        %v2960 = vsub.s32 %v2957, %v2959
        %v2961 = vrot.slane %v2952, %v2960
        %v2963 = vunpack.c.l.s4 1966171168
        %v2964 = vunpack.c.0.s8 %v2963
        %v2965 = vlaneseq
        %v2966 = vshrl.u32 %v2965, 7
        %v2967 = vsub.s32 %v2964, %v2966
        %v2968 = vrot.slane %v2953, %v2967
        %v2970 = vunpack.c.l.s4 1966171168
        %v2971 = vunpack.c.0.s8 %v2970
        %v2972 = vlaneseq
        %v2973 = vshrl.u32 %v2972, 7
        %v2974 = vsub.s32 %v2971, %v2973
        %v2975 = vrot.slane %v2954, %v2974
        %v2977 = vunpack.c.l.s4 1966171168
        %v2978 = vunpack.c.0.s8 %v2977
        %v2979 = vlaneseq
        %v2980 = vshrl.u32 %v2979, 7
        %v2981 = vsub.s32 %v2978, %v2980
        %v2982 = vrot.slane %v2901, %v2981
        %v2983 = vcombine.low %v2961, %v2968
        %v2984 = vcombine.low %v2975, %v2982
        %v2986 = vunpack.c.l.s4 1966171168
        %v2987 = vunpack.c.0.s8 %v2986
        %v2988 = vlaneseq
        %v2989 = vshrl.u32 %v2988, 7
        %v2990 = vsub.s32 %v2987, %v2989
        %v2991 = vrot.slane %v2983, %v2990
        %v2993 = vunpack.c.l.s4 1966171168
        %v2994 = vunpack.c.0.s8 %v2993
        %v2995 = vlaneseq
        %v2996 = vshrl.u32 %v2995, 7
        %v2997 = vsub.s32 %v2994, %v2996
        %v2998 = vrot.slane %v2984, %v2997
        %v2999 = vcombine.low %v2991, %v2998
        %v3002 = vsel %vm585, %v2951, 0.0
        %v3003 = vrot.slane %v3002, 4
        %v3004 = vadd.f32 %v3002, %v3003
        %v3005 = vrot.slane %v3004, 2
        %v3006 = vadd.f32 %v3004, %v3005
        %v3007 = vrot.slane %v3006, 1
        %v3008 = vadd.f32 %v3006, %v3007
        %v3009 = vsel %vm585, %v2999, 0.0
        %v3010 = vrot.slane %v3009, 4
        %v3011 = vadd.f32 %v3009, %v3010
        %v3012 = vrot.slane %v3011, 2
        %v3013 = vadd.f32 %v3011, %v3012
        %v3014 = vrot.slane %v3013, 1
        %v3015 = vadd.f32 %v3013, %v3014
        %v3016 = vmul.f32 %v3008, %v3008
        %v3017 = vmul.f32 %v3015, %v3015
        %v3018 = vadd.f32 %v2721, %v3016
        %v3019 = vadd.f32 %v2722, %v3017
        %v3020 = vmax.f32 %v3018, 1e-24
        %v3021 = vmax.f32 %v3019, 1e-24
        %v3022 = vrsqrt.pop %v3020
        %v3023 = vrsqrt.pop %v3021
        %v3024 = vmul.f32 %v592, %v3022
        %v3025 = vmul.f32 %v599, %v3023
        %v3026 = vmul.f32 %v893, %v3022
        %v3027 = vmul.f32 %v900, %v3023
        %v3028 = vmul.f32 %v1196, %v3022
        %v3029 = vmul.f32 %v1203, %v3023
        %v3030 = vmul.f32 %v1499, %v3022
        %v3031 = vmul.f32 %v1506, %v3023
        %v3032 = vmul.f32 %v1802, %v3022
        %v3033 = vmul.f32 %v1809, %v3023
        %v3034 = vmul.f32 %v2105, %v3022
        %v3035 = vmul.f32 %v2112, %v3023
        %v3036 = vmul.f32 %v2408, %v3022
        %v3037 = vmul.f32 %v2415, %v3023
        %v3038 = vmul.f32 %v2711, %v3022
        %v3039 = vmul.f32 %v2718, %v3023
        %v3040 = vmul.f32 %v3008, %v3022
        %v3041 = vmul.f32 %v3015, %v3023
        %vm3044 = vcmask 1041409
        %v3045 = vsel %vm3044, %v3025, %v3024
        %v3049 = vsel %vm3044, %v3027, %v3026
        %3050 = vrot.lane.b32.xlu0 %v3049, 2
        %v3051 = vpop.permute.xlu0 %3050
        %v3055 = vsel %vm3044, %v3029, %v3028
        %3056 = vrot.lane.b32.xlu0 %v3055, 4
        %v3057 = vpop.permute.xlu0 %3056
        %v3061 = vsel %vm3044, %v3031, %v3030
        %3062 = vrot.lane.b32.xlu0 %v3061, 6
        %v3063 = vpop.permute.xlu0 %3062
        %v3067 = vsel %vm3044, %v3033, %v3032
        %3068 = vrot.lane.b32.xlu0 %v3067, 8
        %v3069 = vpop.permute.xlu0 %3068
        %v3073 = vsel %vm3044, %v3035, %v3034
        %3074 = vrot.lane.b32.xlu0 %v3073, 10
        %v3075 = vpop.permute.xlu0 %3074
        %v3079 = vsel %vm3044, %v3037, %v3036
        %3080 = vrot.lane.b32.xlu0 %v3079, 12
        %v3081 = vpop.permute.xlu0 %3080
        %v3085 = vsel %vm3044, %v3039, %v3038
        %3086 = vrot.lane.b32.xlu0 %v3085, 14
        %v3087 = vpop.permute.xlu0 %3086
        %v3091 = vsel %vm3044, %v3041, %v3040
        %3092 = vrot.lane.b32.xlu0 %v3091, 16
        %v3093 = vpop.permute.xlu0 %3092
        %vm3095 = vcmask 15360
        %v3096 = vsel %vm3095, %v3045, %v3051
        %vm3097 = vcmask 31744
        %v3098 = vsel %vm3097, %v3096, %v3057
        %vm3099 = vcmask 48128
        %v3100 = vsel %vm3099, %v3098, %v3063
        %vm3101 = vcmask 64512
        %v3102 = vsel %vm3101, %v3100, %v3069
        %vm3103 = vcmask 80896
        %v3104 = vsel %vm3103, %v3102, %v3075
        %vm3105 = vcmask 97280
        %v3106 = vsel %vm3105, %v3104, %v3081
        %v3107 = vsel %vm304, %v3106, %v3087
        %vm3108 = vcmask 130048
        %v3109 = vsel %vm3108, %v3107, %v3093
        %vm3110 = vcmask 140288
        %3111 = vst.msk [vmem:[%s161] sm:$0x3] %vm3110, %v3109
        %s3112 = sand.u32 %s74, 1
        %s3113 = scalar_lea.sflag [#allocation4], %s3112
        %s3114 = sand.u32 %s74, 1
        %s3115 = smul.addr %s3114, 2
        %s3116 = scalar_lea.vmem [#allocation5], %s3115
        // Predicated region
        $region33: #{tpu_custom_call.1} parent=27 // pred_check
          %p3117 = pneg %p84
        $region34: #{tpu_custom_call.1} parent=27 // pred_check_branch
          %3119 = sbr.rel (%p3117) target = $region36
        $region35: #{tpu_custom_call.1} parent=27 // pred_region
          %s3121 = ssub.s32 32, 32
          %3122 = vsyncadd %s3113, %s3121
          %s3123 = smul.addr %s19, 32
          %s3124 = scalar_lea.hbm %s2, %s3123
          %s3126 = sshll.u32 %s3116, 4
          %s3127 = int_to_ptr.vmem [resolvable:$true] %s3126
          %3129 = dma.vmem_to_hbm [thread:$0]  %s3127, 32, %s3124, %s3113
        $region36: #{tpu_custom_call.1} parent=27 // pred_fallthru
          _
      $region28: #{tpu_custom_call.1} parent=5 // pred_fallthru
        _
      %p3130 = scmp.le.s32.totalorder 2, %s14
      // Predicated region
      $region37: #{tpu_custom_call.1} parent=5 // pred_check
        %p3131 = pneg %p3130
      $region38: #{tpu_custom_call.1} parent=5 // pred_check_branch
        %3133 = sbr.rel (%p3131) target = $region40
      $region39: #{tpu_custom_call.1} parent=5 // pred_region
        %s3134 = ssub.s32 %s14, 2
        // Predicated region
        $region41: #{tpu_custom_call.1} parent=39 // pred_check
          %p3135 = pneg %p90
        $region42: #{tpu_custom_call.1} parent=39 // pred_check_branch
          %3137 = sbr.rel (%p3135) target = $region44
        $region43: #{tpu_custom_call.1} parent=39 // pred_region
          %s3138 = sand.u32 %s75, 1
          %s3139 = scalar_lea.sflag [#allocation4], %s3138
          %s3140 = sand.u32 %s75, 1
          %s3141 = smul.addr %s3140, 2
          %s3142 = scalar_lea.vmem [#allocation5], %s3141
          %3143 = dma.done %s3139, 32
        $region44: #{tpu_custom_call.1} parent=39 // pred_fallthru
          _
      $region40: #{tpu_custom_call.1} parent=5 // pred_fallthru
        _
    $region6: #{tpu_custom_call.1} parent=1 // loop_footer
      %s18 = sadd.s32 1, %s14
    $region7: #{tpu_custom_call.1} parent=1 // loop_footer_branch
      %13 = sbr.rel target = $region3
    $region8: #{tpu_custom_call.1} parent=1 // loop_exit
      _
    %3144 = vsyncpa [#allocation3], 1
    %s3145 = scalar_lea.sflag [#allocation3], 1
    %3146 = vsyncpa %s3145, 1
    %3147 = vsyncpa [#allocation4], 1
    %s3148 = scalar_lea.sflag [#allocation4], 1
    %3149 = vsyncpa %s3148, 1

</llo_original>
